<compile_context>
chip_gen: v6e
topology: v6e:2x2x1
jax: 0.10.0
libtpu: 0.0.40
codegen_flags: <defaults>
</compile_context>

<pallas_src>
import jax
import jax.numpy as jnp
from jax import lax
from jax.experimental import pallas as pl
from jax.experimental.pallas import tpu as pltpu

NUM_CLASSES = 10
OUT_PAD = 128          # class dim padded to one full lane tile
NEG_INF = -1e30        # padded fc2 bias -> padded lanes fall out of the softmax

C1P = 8                # stage-1 channel dim padded 6 -> 8 (sublane-tile aligned)
C2P = 16               # stage-2 channel dim (already aligned)

M_TILE_1 = 2048        # lane tile over flattened (b, i, j) positions, stage 1
M_TILE_2 = 1024        # lane tile, stage 2: 600x1024 f32 patch block = 2.4 MiB,
                       # double-buffered ~5 MiB -> fits v5e's 16 MiB scoped VMEM
B_TILE_FC = 512        # batch tile for the fc head (weights stay resident)


def _round_up(n, m):
    return -(-n // m) * m


# ----------------------------- Pallas kernels ------------------------------

def conv_tanh_pool_kernel(p_ref, w_ref, b_ref, o_ref):
    """One fused conv + bias + tanh + 2x2 maxpool tile.

    p_ref: (4*K, Mt)   im2col patches, 4 pool slots stacked along K; flattened
                       (b, i, j) pooled-output positions on the LANE axis.
    w_ref: (4*Cp, 4*K) block-diagonal conv weight -> ONE MXU GEMM covers all
                       four pool slots (resident across the grid).
    b_ref: (Cp, 1)     per-channel bias (added after the max; tanh is monotonic
                       so pool(tanh(z + b)) == tanh(max_slots(z) + b)).
    o_ref: (Cp, Mt)    lane-dense pooled activations.
    """
    cp = o_ref.shape[0]
    zt = jnp.dot(w_ref[...], p_ref[...], preferred_element_type=jnp.float32)
    z = jnp.maximum(jnp.maximum(zt[0 * cp:1 * cp], zt[1 * cp:2 * cp]),
                    jnp.maximum(zt[2 * cp:3 * cp], zt[3 * cp:4 * cp]))
    o_ref[...] = jnp.tanh(z + b_ref[...])


def fc_head_kernel(x_ref, w1_ref, b1_ref, w2_ref, b2_ref, o_ref):
    """fc1 + tanh + fc2 + log_softmax for one batch tile.  Padded class lanes
    carry bias -1e30 so they drop out of the max/sum with no masking work."""
    h = jnp.tanh(jnp.dot(x_ref[...], w1_ref[...],
                         preferred_element_type=jnp.float32) + b1_ref[...])
    logits = jnp.dot(h, w2_ref[...],
                     preferred_element_type=jnp.float32) + b2_ref[...]
    m = jnp.max(logits, axis=-1, keepdims=True)
    shifted = logits - m
    lse = jnp.log(jnp.sum(jnp.exp(shifted), axis=-1, keepdims=True))
    o_ref[...] = shifted - lse


# --------------------------- wrapper / weight prep --------------------------

def _patches_T(xpad, oh, ow, k=5):
    """Transposed, slot-stacked im2col patches.

    xpad: (B, Hp, Wp, C) zero-padded activations.
    Returns (4*k*k*C, B*oh*ow): row = slot*(k*k*C) + (dy*k+dx)*C + c,
    column = b*oh*ow + i*ow + j  (pooled output position, on the lane axis).
    """
    B, _, _, C = xpad.shape
    slots = []
    for sy in (0, 1):
        for sx in (0, 1):
            taps = []
            for dy in range(k):
                for dx in range(k):
                    taps.append(xpad[:, sy + dy: sy + dy + 2 * oh - 1: 2,
                                        sx + dx: sx + dx + 2 * ow - 1: 2, :])
            t = jnp.stack(taps, axis=3)                    # (B, oh, ow, k*k, C)
            slots.append(t.reshape(B * oh * ow, k * k * C).T)
    return jnp.concatenate(slots, axis=0)                  # (4*k*k*C, B*oh*ow)


def _conv_stage(xpad, w_t, b_p, cp, oh, ow, m_tile):
    """conv(5x5) + bias + tanh + 2x2 maxpool as one gridded pallas_call."""
    pt = _patches_T(xpad, oh, ow)                          # (4K, M)
    kk, m = pt.shape
    mt = min(m_tile, _round_up(m, 128))                    # lane tile, mult of 128
    m_pad = _round_up(m, mt)
    pt = jnp.pad(pt, ((0, 0), (0, m_pad - m)))
    out = pl.pallas_call(
        conv_tanh_pool_kernel,
        out_shape=jax.ShapeDtypeStruct((cp, m_pad), jnp.float32),
        grid=(m_pad // mt,),
        in_specs=[pl.BlockSpec((kk, mt), lambda i: (0, i)),      # streamed patches
                  pl.BlockSpec(w_t.shape, lambda i: (0, 0)),     # resident weight
                  pl.BlockSpec(b_p.shape, lambda i: (0, 0))],    # resident bias
        out_specs=pl.BlockSpec((cp, mt), lambda i: (0, i)),      # lane-dense store
        compiler_params=pltpu.CompilerParams(
            dimension_semantics=("parallel",)),
    )(pt, w_t, b_p)
    return out[:, :m]


def prepare_params(params):
    """One-time weight layout prep (hoisted out of the per-call forward)."""
    w1, b1, w2, b2, wf1, bf1, wf2, bf2 = params
    f32 = jnp.float32
    # conv1: (6,1,5,5) -> rows (6, 25), col index = dy*5 + dx; block-diag over slots.
    w1rows = w1.reshape(6, 25).astype(f32)
    w1t = jnp.zeros((4 * C1P, 4 * 25), f32)
    for s in range(4):
        w1t = w1t.at[s * C1P: s * C1P + 6, s * 25:(s + 1) * 25].set(w1rows)
    b1p = jnp.zeros((C1P, 1), f32).at[:6, 0].set(b1.astype(f32))
    # conv2: (16,6,5,5) -> rows (16, 150), col index = (dy*5+dx)*6 + c; block-diag.
    w2rows = jnp.transpose(w2, (2, 3, 1, 0)).reshape(150, 16).T.astype(f32)
    w2t = jnp.zeros((4 * C2P, 4 * 150), f32)
    for s in range(4):
        w2t = w2t.at[s * C2P:(s + 1) * C2P, s * 150:(s + 1) * 150].set(w2rows)
    b2p = b2.reshape(C2P, 1).astype(f32)
    # fc1: permute input columns from torch's (c, i, j) flatten to (i, j, c) so the
    # kernel consumes the conv2 output layout with no per-call transpose of weights.
    wf1p = wf1.T.reshape(16, 49, 128).transpose(1, 0, 2).reshape(784, 128).astype(f32)
    bf1r = bf1.reshape(1, 128).astype(f32)
    # fc2: pad class dim to a full 128-lane tile; padded bias = -1e30 bakes the
    # softmax mask into the weights (requires f32).
    wf2p = jnp.zeros((128, OUT_PAD), f32).at[:, :NUM_CLASSES].set(wf2.T.astype(f32))
    bf2p = jnp.full((1, OUT_PAD), NEG_INF, f32).at[0, :NUM_CLASSES].set(bf2.astype(f32))
    return (w1t, b1p, w2t, b2p, wf1p, bf1r, wf2p, bf2p)


@jax.jit
def lenet_forward(x, prepped):
    """x: (B, 1, 28, 28) float32 -> (B, 10) log-probabilities."""
    w1t, b1p, w2t, b2p, wf1p, bf1r, wf2p, bf2p = prepped
    B = x.shape[0]
    x = x.astype(jnp.float32).reshape(B, 28, 28)

    # ---- stage 1: conv1(1->6, 5x5, pad 2) + tanh + maxpool 2x2 ----
    xp = jnp.pad(x, ((0, 0), (2, 2), (2, 2)))[..., None]           # (B,32,32,1)
    a1 = _conv_stage(xp, w1t, b1p, C1P, 14, 14, M_TILE_1)          # (8, B*196)

    # ---- stage 2: conv2(6->16, 5x5, pad 2) + tanh + maxpool 2x2 ----
    a1sp = a1[:6].reshape(6, B, 14, 14).transpose(1, 2, 3, 0)      # (B,14,14,6)
    a1pad = jnp.pad(a1sp, ((0, 0), (2, 2), (2, 2), (0, 0)))        # (B,18,18,6)
    a2 = _conv_stage(a1pad, w2t, b2p, C2P, 7, 7, M_TILE_2)         # (16, B*49)

    # ---- stage 3: fc1 + tanh + fc2 + log_softmax ----
    feats = a2.reshape(16, B, 7, 7).transpose(1, 2, 3, 0).reshape(B, 784)
    bt = min(B_TILE_FC, _round_up(B, 8))
    b_pad = _round_up(B, bt)
    featsp = jnp.pad(feats, ((0, b_pad - B), (0, 0)))
    logp = pl.pallas_call(
        fc_head_kernel,
        out_shape=jax.ShapeDtypeStruct((b_pad, OUT_PAD), jnp.float32),
        grid=(b_pad // bt,),
        in_specs=[pl.BlockSpec((bt, 784), lambda i: (i, 0)),       # streamed rows
                  pl.BlockSpec((784, 128), lambda i: (0, 0)),      # resident fc1
                  pl.BlockSpec((1, 128), lambda i: (0, 0)),
                  pl.BlockSpec((128, OUT_PAD), lambda i: (0, 0)),  # resident fc2
                  pl.BlockSpec((1, OUT_PAD), lambda i: (0, 0))],
        out_specs=pl.BlockSpec((bt, OUT_PAD), lambda i: (i, 0)),
        compiler_params=pltpu.CompilerParams(
            dimension_semantics=("parallel",)),
    )(featsp, wf1p, bf1r, wf2p, bf2p)
    return logp[:B, :NUM_CLASSES]


# ------------------------------ init / reference ----------------------------

def init_params(key):
    """nn.Conv2d / nn.Linear shaped params with uniform(+-1/sqrt(fan_in)) init."""
    ks = jax.random.split(key, 8)

    def u(k, shape, fan_in):
        b = 1.0 / (fan_in ** 0.5)
        return jax.random.uniform(k, shape, jnp.float32, -b, b)

    w1 = u(ks[0], (6, 1, 5, 5), 25);     b1 = u(ks[1], (6,), 25)
    w2 = u(ks[2], (16, 6, 5, 5), 150);   b2 = u(ks[3], (16,), 150)
    wf1 = u(ks[4], (128, 784), 784);     bf1 = u(ks[5], (128,), 784)
    wf2 = u(ks[6], (10, 128), 128);      bf2 = u(ks[7], (10,), 128)
    return (w1, b1, w2, b2, wf1, bf1, wf2, bf2)


def reference_forward(x, params):
    """Pure-JAX reference of the PyTorch lenet forward."""
    w1, b1, w2, b2, wf1, bf1, wf2, bf2 = params

    def conv(z, w):
        return lax.conv_general_dilated(
            z, w, window_strides=(1, 1), padding=((2, 2), (2, 2)),
            dimension_numbers=('NCHW', 'OIHW', 'NCHW'))

    def pool(z):
        Bz, C, H, W = z.shape
        return z.reshape(Bz, C, H // 2, 2, W // 2, 2).max(axis=(3, 5))

    B = x.shape[0]
    z = pool(jnp.tanh(conv(x, w1) + b1[None, :, None, None]))
    z = pool(jnp.tanh(conv(z, w2) + b2[None, :, None, None]))
    z = z.reshape(B, -1)                      # NCHW flatten: index = c*49 + i*7 + j
    z = jnp.tanh(z @ wf1.T + bf1)
    z = z @ wf2.T + bf2
    return jax.nn.log_softmax(z, axis=1)


if __name__ == "__main__":
    key = jax.random.PRNGKey(0)
    kx, kp = jax.random.split(key)
    x = jax.random.normal(kx, (2, 1, 28, 28), jnp.float32)
    params = init_params(kp)

    prepped = prepare_params(params)          # hoisted one-time weight prep
    out = jax.block_until_ready(lenet_forward(x, prepped))

    ref = reference_forward(x, params)
    assert out.shape == (2, NUM_CLASSES), out.shape
    err = float(jnp.max(jnp.abs(out - ref)))
    assert jnp.allclose(out, ref, atol=2e-4, rtol=2e-4), f"max abs err {err}"
    print("KERNEL_OK")
</pallas_src>

<mosaic_0001>
module attributes {stable_mosaic.version = 11 : i64} {
  func.func @conv_tanh_pool_kernel(%arg0: i32, %arg1: memref<100x512xf32, #tpu.memory_space<vmem>>, %arg2: memref<32x100xf32, #tpu.memory_space<vmem>>, %arg3: memref<8x1xf32, #tpu.memory_space<vmem>>, %arg4: memref<8x512xf32, #tpu.memory_space<vmem>>) attributes {dimension_semantics = [#tpu.dimension_semantics<parallel>], iteration_bounds = array<i64: 1>, scalar_prefetch = 0 : i64, scratch_operands = 0 : i64, tpu.core_type = #tpu.core_type<tc>, window_params = [{transform_indices = @transform_0, window_bounds = array<i64: 100, 512>}, {pipeline_mode = #tpu.pipeline_mode<synchronous>, transform_indices = @transform_1, window_bounds = array<i64: 32, 100>}, {pipeline_mode = #tpu.pipeline_mode<synchronous>, transform_indices = @transform_2, window_bounds = array<i64: 8, 1>}, {transform_indices = @transform_3, window_bounds = array<i64: 8, 512>}]} {
    %c0 = arith.constant 0 : index
    %c0_0 = arith.constant 0 : index
    %0 = vector.load %arg2[%c0, %c0_0] : memref<32x100xf32, #tpu.memory_space<vmem>>, vector<32x100xf32>
    %c0_1 = arith.constant 0 : index
    %c0_2 = arith.constant 0 : index
    %1 = vector.load %arg1[%c0_1, %c0_2] : memref<100x512xf32, #tpu.memory_space<vmem>>, vector<100x512xf32>
    %cst = arith.constant dense<0.000000e+00> : vector<32x512xf32>
    %2 = tpu.matmul %0, %1, %cst {dimension_numbers = #tpu.dot_dimension_numbers<[1], [0], [0], [1], [0, 0, 1, 1], [], []>} : vector<32x100xf32>, vector<100x512xf32>, vector<32x512xf32> -> vector<32x512xf32>
    %3 = vector.extract_strided_slice %2 {offsets = [0, 0], sizes = [8, 512], strides = [1, 1]} : vector<32x512xf32> to vector<8x512xf32>
    %4 = vector.extract_strided_slice %2 {offsets = [8, 0], sizes = [8, 512], strides = [1, 1]} : vector<32x512xf32> to vector<8x512xf32>
    %5 = arith.maximumf %3, %4 : vector<8x512xf32>
    %6 = vector.extract_strided_slice %2 {offsets = [16, 0], sizes = [8, 512], strides = [1, 1]} : vector<32x512xf32> to vector<8x512xf32>
    %7 = vector.extract_strided_slice %2 {offsets = [24, 0], sizes = [8, 512], strides = [1, 1]} : vector<32x512xf32> to vector<8x512xf32>
    %8 = arith.maximumf %6, %7 : vector<8x512xf32>
    %9 = arith.maximumf %5, %8 : vector<8x512xf32>
    %c0_3 = arith.constant 0 : index
    %c0_4 = arith.constant 0 : index
    %10 = vector.load %arg3[%c0_3, %c0_4] : memref<8x1xf32, #tpu.memory_space<vmem>>, vector<8x1xf32>
    %11 = vector.broadcast %10 : vector<8x1xf32> to vector<8x512xf32>
    %12 = arith.addf %9, %11 : vector<8x512xf32>
    %13 = math.tanh %12 : vector<8x512xf32>
    %c0_5 = arith.constant 0 : index
    %c0_6 = arith.constant 0 : index
    %14 = vector.load %arg4[%c0_5, %c0_6] : memref<8x512xf32, #tpu.memory_space<vmem>>, vector<8x512xf32>
    tpu.vector_store %arg4[%c0_5, %c0_6], %13 {strides = array<i32>} : memref<8x512xf32, #tpu.memory_space<vmem>>, vector<8x512xf32>,
    return
  }
  func.func @transform_0(%arg0: i32) -> (i32, i32) {
    %c0_i32 = arith.constant 0 : i32
    %c0_i32_0 = arith.constant 0 : i32
    return %c0_i32, %arg0 : i32, i32
  }
  func.func @transform_1(%arg0: i32) -> (i32, i32) {
    %c0_i32 = arith.constant 0 : i32
    %c0_i32_0 = arith.constant 0 : i32
    %c0_i32_1 = arith.constant 0 : i32
    return %c0_i32, %c0_i32_0 : i32, i32
  }
  func.func @transform_2(%arg0: i32) -> (i32, i32) {
    %c0_i32 = arith.constant 0 : i32
    %c0_i32_0 = arith.constant 0 : i32
    %c0_i32_1 = arith.constant 0 : i32
    return %c0_i32, %c0_i32_0 : i32, i32
  }
  func.func @transform_3(%arg0: i32) -> (i32, i32) {
    %c0_i32 = arith.constant 0 : i32
    %c0_i32_0 = arith.constant 0 : i32
    return %c0_i32, %arg0 : i32, i32
  }
}

module attributes {stable_mosaic.version = 11 : i64} {
  func.func @conv_tanh_pool_kernel(%arg0: i32, %arg1: memref<600x128xf32, #tpu.memory_space<vmem>>, %arg2: memref<64x600xf32, #tpu.memory_space<vmem>>, %arg3: memref<16x1xf32, #tpu.memory_space<vmem>>, %arg4: memref<16x128xf32, #tpu.memory_space<vmem>>) attributes {dimension_semantics = [#tpu.dimension_semantics<parallel>], iteration_bounds = array<i64: 1>, scalar_prefetch = 0 : i64, scratch_operands = 0 : i64, tpu.core_type = #tpu.core_type<tc>, window_params = [{transform_indices = @transform_0, window_bounds = array<i64: 600, 128>}, {pipeline_mode = #tpu.pipeline_mode<synchronous>, transform_indices = @transform_1, window_bounds = array<i64: 64, 600>}, {pipeline_mode = #tpu.pipeline_mode<synchronous>, transform_indices = @transform_2, window_bounds = array<i64: 16, 1>}, {transform_indices = @transform_3, window_bounds = array<i64: 16, 128>}]} {
    %c0 = arith.constant 0 : index
    %c0_0 = arith.constant 0 : index
    %0 = vector.load %arg2[%c0, %c0_0] : memref<64x600xf32, #tpu.memory_space<vmem>>, vector<64x600xf32>
    %c0_1 = arith.constant 0 : index
    %c0_2 = arith.constant 0 : index
    %1 = vector.load %arg1[%c0_1, %c0_2] : memref<600x128xf32, #tpu.memory_space<vmem>>, vector<600x128xf32>
    %cst = arith.constant dense<0.000000e+00> : vector<64x128xf32>
    %2 = tpu.matmul %0, %1, %cst {dimension_numbers = #tpu.dot_dimension_numbers<[1], [0], [0], [1], [0, 0, 1, 1], [], []>} : vector<64x600xf32>, vector<600x128xf32>, vector<64x128xf32> -> vector<64x128xf32>
    %3 = vector.extract_strided_slice %2 {offsets = [0, 0], sizes = [16, 128], strides = [1, 1]} : vector<64x128xf32> to vector<16x128xf32>
    %4 = vector.extract_strided_slice %2 {offsets = [16, 0], sizes = [16, 128], strides = [1, 1]} : vector<64x128xf32> to vector<16x128xf32>
    %5 = arith.maximumf %3, %4 : vector<16x128xf32>
    %6 = vector.extract_strided_slice %2 {offsets = [32, 0], sizes = [16, 128], strides = [1, 1]} : vector<64x128xf32> to vector<16x128xf32>
    %7 = vector.extract_strided_slice %2 {offsets = [48, 0], sizes = [16, 128], strides = [1, 1]} : vector<64x128xf32> to vector<16x128xf32>
    %8 = arith.maximumf %6, %7 : vector<16x128xf32>
    %9 = arith.maximumf %5, %8 : vector<16x128xf32>
    %c0_3 = arith.constant 0 : index
    %c0_4 = arith.constant 0 : index
    %10 = vector.load %arg3[%c0_3, %c0_4] : memref<16x1xf32, #tpu.memory_space<vmem>>, vector<16x1xf32>
    %11 = vector.broadcast %10 : vector<16x1xf32> to vector<16x128xf32>
    %12 = arith.addf %9, %11 : vector<16x128xf32>
    %13 = math.tanh %12 : vector<16x128xf32>
    %c0_5 = arith.constant 0 : index
    %c0_6 = arith.constant 0 : index
    %14 = vector.load %arg4[%c0_5, %c0_6] : memref<16x128xf32, #tpu.memory_space<vmem>>, vector<16x128xf32>
    tpu.vector_store %arg4[%c0_5, %c0_6], %13 {strides = array<i32>} : memref<16x128xf32, #tpu.memory_space<vmem>>, vector<16x128xf32>,
    return
  }
  func.func @transform_0(%arg0: i32) -> (i32, i32) {
    %c0_i32 = arith.constant 0 : i32
    %c0_i32_0 = arith.constant 0 : i32
    return %c0_i32, %arg0 : i32, i32
  }
  func.func @transform_1(%arg0: i32) -> (i32, i32) {
    %c0_i32 = arith.constant 0 : i32
    %c0_i32_0 = arith.constant 0 : i32
    %c0_i32_1 = arith.constant 0 : i32
    return %c0_i32, %c0_i32_0 : i32, i32
  }
  func.func @transform_2(%arg0: i32) -> (i32, i32) {
    %c0_i32 = arith.constant 0 : i32
    %c0_i32_0 = arith.constant 0 : i32
    %c0_i32_1 = arith.constant 0 : i32
    return %c0_i32, %c0_i32_0 : i32, i32
  }
  func.func @transform_3(%arg0: i32) -> (i32, i32) {
    %c0_i32 = arith.constant 0 : i32
    %c0_i32_0 = arith.constant 0 : i32
    return %c0_i32, %arg0 : i32, i32
  }
}

module attributes {stable_mosaic.version = 11 : i64} {
  func.func @fc_head_kernel(%arg0: i32, %arg1: memref<8x784xf32, #tpu.memory_space<vmem>>, %arg2: memref<784x128xf32, #tpu.memory_space<vmem>>, %arg3: memref<1x128xf32, #tpu.memory_space<vmem>>, %arg4: memref<128x128xf32, #tpu.memory_space<vmem>>, %arg5: memref<1x128xf32, #tpu.memory_space<vmem>>, %arg6: memref<8x128xf32, #tpu.memory_space<vmem>>) attributes {dimension_semantics = [#tpu.dimension_semantics<parallel>], iteration_bounds = array<i64: 1>, scalar_prefetch = 0 : i64, scratch_operands = 0 : i64, tpu.core_type = #tpu.core_type<tc>, window_params = [{transform_indices = @transform_0, window_bounds = array<i64: 8, 784>}, {pipeline_mode = #tpu.pipeline_mode<synchronous>, transform_indices = @transform_1, window_bounds = array<i64: 784, 128>}, {pipeline_mode = #tpu.pipeline_mode<synchronous>, transform_indices = @transform_2, window_bounds = array<i64: 1, 128>}, {pipeline_mode = #tpu.pipeline_mode<synchronous>, transform_indices = @transform_3, window_bounds = array<i64: 128, 128>}, {pipeline_mode = #tpu.pipeline_mode<synchronous>, transform_indices = @transform_4, window_bounds = array<i64: 1, 128>}, {transform_indices = @transform_5, window_bounds = array<i64: 8, 128>}]} {
    %c0 = arith.constant 0 : index
    %c0_0 = arith.constant 0 : index
    %0 = vector.load %arg1[%c0, %c0_0] : memref<8x784xf32, #tpu.memory_space<vmem>>, vector<8x784xf32>
    %c0_1 = arith.constant 0 : index
    %c0_2 = arith.constant 0 : index
    %1 = vector.load %arg2[%c0_1, %c0_2] : memref<784x128xf32, #tpu.memory_space<vmem>>, vector<784x128xf32>
    %cst = arith.constant dense<0.000000e+00> : vector<8x128xf32>
    %2 = tpu.matmul %0, %1, %cst {dimension_numbers = #tpu.dot_dimension_numbers<[1], [0], [0], [1], [0, 0, 1, 1], [], []>} : vector<8x784xf32>, vector<784x128xf32>, vector<8x128xf32> -> vector<8x128xf32>
    %c0_3 = arith.constant 0 : index
    %c0_4 = arith.constant 0 : index
    %3 = vector.load %arg3[%c0_3, %c0_4] : memref<1x128xf32, #tpu.memory_space<vmem>>, vector<1x128xf32>
    %4 = vector.broadcast %3 : vector<1x128xf32> to vector<8x128xf32>
    %5 = arith.addf %2, %4 : vector<8x128xf32>
    %6 = math.tanh %5 : vector<8x128xf32>
    %c0_5 = arith.constant 0 : index
    %c0_6 = arith.constant 0 : index
    %7 = vector.load %arg4[%c0_5, %c0_6] : memref<128x128xf32, #tpu.memory_space<vmem>>, vector<128x128xf32>
    %cst_7 = arith.constant dense<0.000000e+00> : vector<8x128xf32>
    %8 = tpu.matmul %6, %7, %cst_7 {dimension_numbers = #tpu.dot_dimension_numbers<[1], [0], [0], [1], [0, 0, 1, 1], [], []>} : vector<8x128xf32>, vector<128x128xf32>, vector<8x128xf32> -> vector<8x128xf32>
    %c0_8 = arith.constant 0 : index
    %c0_9 = arith.constant 0 : index
    %9 = vector.load %arg5[%c0_8, %c0_9] : memref<1x128xf32, #tpu.memory_space<vmem>>, vector<1x128xf32>
    %10 = vector.broadcast %9 : vector<1x128xf32> to vector<8x128xf32>
    %11 = arith.addf %8, %10 : vector<8x128xf32>
    %cst_10 = arith.constant dense<0xFF800000> : vector<8xf32>
    %12 = vector.multi_reduction <maximumf>, %11, %cst_10 [1] : vector<8x128xf32> to vector<8xf32>
    %13 = vector.shape_cast %12 : vector<8xf32> to vector<8x1xf32>
    %14 = vector.broadcast %13 : vector<8x1xf32> to vector<8x128xf32>
    %15 = arith.subf %11, %14 : vector<8x128xf32>
    %16 = math.exp %15 : vector<8x128xf32>
    %cst_11 = arith.constant dense<0.000000e+00> : vector<8xf32>
    %17 = vector.multi_reduction <add>, %16, %cst_11 [1] : vector<8x128xf32> to vector<8xf32>
    %18 = vector.shape_cast %17 : vector<8xf32> to vector<8x1xf32>
    %19 = math.log %18 : vector<8x1xf32>
    %20 = vector.broadcast %19 : vector<8x1xf32> to vector<8x128xf32>
    %21 = arith.subf %15, %20 : vector<8x128xf32>
    %c0_12 = arith.constant 0 : index
    %c0_13 = arith.constant 0 : index
    %22 = vector.load %arg6[%c0_12, %c0_13] : memref<8x128xf32, #tpu.memory_space<vmem>>, vector<8x128xf32>
    tpu.vector_store %arg6[%c0_12, %c0_13], %21 {strides = array<i32>} : memref<8x128xf32, #tpu.memory_space<vmem>>, vector<8x128xf32>,
    return
  }
  func.func @transform_0(%arg0: i32) -> (i32, i32) {
    %c0_i32 = arith.constant 0 : i32
    %c0_i32_0 = arith.constant 0 : i32
    return %arg0, %c0_i32 : i32, i32
  }
  func.func @transform_1(%arg0: i32) -> (i32, i32) {
    %c0_i32 = arith.constant 0 : i32
    %c0_i32_0 = arith.constant 0 : i32
    %c0_i32_1 = arith.constant 0 : i32
    return %c0_i32, %c0_i32_0 : i32, i32
  }
  func.func @transform_2(%arg0: i32) -> (i32, i32) {
    %c0_i32 = arith.constant 0 : i32
    %c0_i32_0 = arith.constant 0 : i32
    %c0_i32_1 = arith.constant 0 : i32
    return %c0_i32, %c0_i32_0 : i32, i32
  }
  func.func @transform_3(%arg0: i32) -> (i32, i32) {
    %c0_i32 = arith.constant 0 : i32
    %c0_i32_0 = arith.constant 0 : i32
    %c0_i32_1 = arith.constant 0 : i32
    return %c0_i32, %c0_i32_0 : i32, i32
  }
  func.func @transform_4(%arg0: i32) -> (i32, i32) {
    %c0_i32 = arith.constant 0 : i32
    %c0_i32_0 = arith.constant 0 : i32
    %c0_i32_1 = arith.constant 0 : i32
    return %c0_i32, %c0_i32_0 : i32, i32
  }
  func.func @transform_5(%arg0: i32) -> (i32, i32) {
    %c0_i32 = arith.constant 0 : i32
    %c0_i32_0 = arith.constant 0 : i32
    return %arg0, %c0_i32 : i32, i32
  }
}

</mosaic_0001>

<llo_original>
// kernel: lenet_forward.3
$region0: #{lenet_forward.3}
  #allocation0 [shape = 'u32[]', space=smem, size = 0x4, offset = 0x4, fixed_abs, tag = 'smem constant byte address 0x4 - core index']
  #allocation1 [shape = 'u32[144,128]{1,0:T(1,128)}', space=vmem, size = 0x12000, scoped, tag = 'internal scratch']
  %s0 = inlined_call_operand.vmem [shape: f32[100,512], index: 0, kind: input, shape index: {}]
  %s1 = inlined_call_operand.vmem [shape: f32[32,100], index: 1, kind: input, shape index: {}]
  %s2 = inlined_call_operand.vmem [shape: f32[8,1], index: 2, kind: input, shape index: {}]
  %s3 = inlined_call_operand.vmem [shape: f32[8,512], index: 3, kind: output, shape index: {}]
  %s4 = sld [smem:[#allocation0]]
  $region22: #{lenet_forward.3} parent=0
    _
  %s6 = ssub.s32 1, %s4
  %s7 = scalar_select 0, %s6, %s4
  // Predicated region
  $region2: #{lenet_forward.3} parent=0 // pred_check
    _
  $region3: #{lenet_forward.3} parent=0 // pred_check_branch
    %9 = sbr.rel (0) target = $region5
  $region4: #{lenet_forward.3} parent=0 // pred_region
    _
  $region5: #{lenet_forward.3} parent=0 // pred_fallthru
    _
  // Predicated region
  $region6: #{lenet_forward.3} parent=0 // pred_check
    _
  $region7: #{lenet_forward.3} parent=0 // pred_check_branch
    %11 = sbr.rel (0) target = $region9
  $region8: #{lenet_forward.3} parent=0 // pred_region
    _
  $region9: #{lenet_forward.3} parent=0 // pred_fallthru
    _
  // Predicated region
  $region10: #{lenet_forward.3} parent=0 // pred_check
    _
  $region11: #{lenet_forward.3} parent=0 // pred_check_branch
    %13 = sbr.rel (0) target = $region13
  $region12: #{lenet_forward.3} parent=0 // pred_region
    _
  $region13: #{lenet_forward.3} parent=0 // pred_fallthru
    _
  %v14 = vld [vmem:[%s1] sm:$0xff]
  %v15 = vld [vmem:[%s1 + $0x8] sm:$0xff]
  %v16 = vld [vmem:[%s1 + $0x10] sm:$0xff]
  %v17 = vld [vmem:[%s1 + $0x18] sm:$0xff]
  %v18 = vld [vmem:[%s0] sm:$0xff]
  %v19 = vld [vmem:[%s0 + $0x8] sm:$0xff]
  %v20 = vld [vmem:[%s0 + $0x10] sm:$0xff]
  %v21 = vld [vmem:[%s0 + $0x18] sm:$0xff]
  %v22 = vld [vmem:[%s0 + $0x20] sm:$0xff]
  %v23 = vld [vmem:[%s0 + $0x28] sm:$0xff]
  %v24 = vld [vmem:[%s0 + $0x30] sm:$0xff]
  %v25 = vld [vmem:[%s0 + $0x38] sm:$0xff]
  %v26 = vld [vmem:[%s0 + $0x40] sm:$0xff]
  %v27 = vld [vmem:[%s0 + $0x48] sm:$0xff]
  %v28 = vld [vmem:[%s0 + $0x50] sm:$0xff]
  %v29 = vld [vmem:[%s0 + $0x58] sm:$0xff]
  %v30 = vld [vmem:[%s0 + $0x60] sm:$0xff]
  %v31 = vld [vmem:[%s0 + $0x68] sm:$0xff]
  %v32 = vld [vmem:[%s0 + $0x70] sm:$0xff]
  %v33 = vld [vmem:[%s0 + $0x78] sm:$0xff]
  %v34 = vld [vmem:[%s0 + $0x80] sm:$0xff]
  %v35 = vld [vmem:[%s0 + $0x88] sm:$0xff]
  %v36 = vld [vmem:[%s0 + $0x90] sm:$0xff]
  %v37 = vld [vmem:[%s0 + $0x98] sm:$0xff]
  %v38 = vld [vmem:[%s0 + $0xa0] sm:$0xff]
  %v39 = vld [vmem:[%s0 + $0xa8] sm:$0xff]
  %v40 = vld [vmem:[%s0 + $0xb0] sm:$0xff]
  %v41 = vld [vmem:[%s0 + $0xb8] sm:$0xff]
  %v42 = vld [vmem:[%s0 + $0xc0] sm:$0xff]
  %v43 = vld [vmem:[%s0 + $0xc8] sm:$0xff]
  %v44 = vld [vmem:[%s0 + $0xd0] sm:$0xff]
  %v45 = vld [vmem:[%s0 + $0xd8] sm:$0xff]
  %v46 = vld [vmem:[%s0 + $0xe0] sm:$0xff]
  %v47 = vld [vmem:[%s0 + $0xe8] sm:$0xff]
  %v48 = vld [vmem:[%s0 + $0xf0] sm:$0xff]
  %v49 = vld [vmem:[%s0 + $0xf8] sm:$0xff]
  %v50 = vld [vmem:[%s0 + $0x100] sm:$0xff]
  %v51 = vld [vmem:[%s0 + $0x108] sm:$0xff]
  %v52 = vld [vmem:[%s0 + $0x110] sm:$0xff]
  %v53 = vld [vmem:[%s0 + $0x118] sm:$0xff]
  %v54 = vld [vmem:[%s0 + $0x120] sm:$0xff]
  %v55 = vld [vmem:[%s0 + $0x128] sm:$0xff]
  %v56 = vld [vmem:[%s0 + $0x130] sm:$0xff]
  %v57 = vld [vmem:[%s0 + $0x138] sm:$0xff]
  %v58 = vld [vmem:[%s0 + $0x140] sm:$0xff]
  %v59 = vld [vmem:[%s0 + $0x148] sm:$0xff]
  %v60 = vld [vmem:[%s0 + $0x150] sm:$0xff]
  %v61 = vld [vmem:[%s0 + $0x158] sm:$0xff]
  %v62 = vld [vmem:[%s0 + $0x160] sm:$0xff]
  %v63 = vld [vmem:[%s0 + $0x168] sm:$0xff]
  %v64 = vld [vmem:[%s0 + $0x170] sm:$0xff]
  %v65 = vld [vmem:[%s0 + $0x178] sm:$0xff]
  %v66 = vld [vmem:[%s0 + $0x180] sm:$0xf]
  %v67 = vld [vmem:[%s0 + $0x188] sm:$0xf]
  %v68 = vld [vmem:[%s0 + $0x190] sm:$0xf]
  %v69 = vld [vmem:[%s0 + $0x198] sm:$0xf]
  %vm70 = vcmask 818176
  %v72 = vsel %vm70, %v14, 0
  %v75 = vsel %vm70, %v15, 0
  %v78 = vsel %vm70, %v16, 0
  %v81 = vsel %vm70, %v17, 0
  %vm83 = vcmask 1043456
  %v85 = vsel %vm83, %v66, 0
  %v88 = vsel %vm83, %v67, 0
  %v91 = vsel %vm83, %v68, 0
  %v94 = vsel %vm83, %v69, 0
  %96 = vmatprep.subr.mxu0 0.0
  %97 = vmatpush1.msra.mxu0 0.0
  %98 = vmatprep.subr.mxu0 0.0
  %99 = vmatpush1.msra.mxu0 0.0
  %100 = vmatprep.subr.mxu0 0.0
  %101 = vmatpush1.msra.mxu0 0.0
  %102 = vmatprep.subr.mxu0 %v88
  %103 = vmatpush1.msra.mxu0 %v85
  %104 = vmatprep.subr.mxu0 %v63
  %105 = vmatpush1.msra.mxu0 %v62
  %106 = vmatprep.subr.mxu0 %v59
  %107 = vmatpush1.msra.mxu0 %v58
  %108 = vmatprep.subr.mxu0 %v55
  %109 = vmatpush1.msra.mxu0 %v54
  %110 = vmatprep.subr.mxu0 %v51
  %111 = vmatpush1.msra.mxu0 %v50
  %112 = vmatprep.subr.mxu0 %v47
  %113 = vmatpush1.msra.mxu0 %v46
  %114 = vmatprep.subr.mxu0 %v43
  %115 = vmatpush1.msra.mxu0 %v42
  %116 = vmatprep.subr.mxu0 %v39
  %117 = vmatpush1.msra.mxu0 %v38
  %118 = vmatprep.subr.mxu0 %v35
  %119 = vmatpush1.msra.mxu0 %v34
  %120 = vmatprep.subr.mxu0 %v31
  %121 = vmatpush1.msra.mxu0 %v30
  %122 = vmatprep.subr.mxu0 %v27
  %123 = vmatpush1.msra.mxu0 %v26
  %124 = vmatprep.subr.mxu0 %v23
  %125 = vmatpush1.msra.mxu0 %v22
  %126 = vmatprep.subr.mxu0 %v19
  %127 = vmatpush1.msra.mxu0 %v18
  %128 = vmatprep.subr.mxu0 0.0
  %129 = vmatpush2.msra.mxu0 0.0
  %130 = vmatprep.subr.mxu0 0.0
  %131 = vmatpush2.msra.mxu0 0.0
  %132 = vmatprep.subr.mxu0 0.0
  %133 = vmatpush2.msra.mxu0 0.0
  %134 = vmatprep.subr.mxu0 0.0
  %135 = vmatpush2.msra.mxu0 0.0
  %136 = vmatprep.subr.mxu0 0.0
  %137 = vmatpush2.msra.mxu0 0.0
  %138 = vmatprep.subr.mxu0 0.0
  %139 = vmatpush2.msra.mxu0 0.0
  %140 = vmatprep.subr.mxu0 0.0
  %141 = vmatpush2.msra.mxu0 0.0
  %142 = vmatprep.subr.mxu0 0.0
  %143 = vmatpush2.msra.mxu0 0.0
  %144 = vmatprep.subr.mxu0 0.0
  %145 = vmatpush2.msra.mxu0 0.0
  %146 = vmatprep.subr.mxu0 0.0
  %147 = vmatpush2.msra.mxu0 0.0
  %148 = vmatprep.subr.mxu0 0.0
  %149 = vmatpush2.msra.mxu0 0.0
  %150 = vmatprep.subr.mxu0 0.0
  %151 = vmatpush2.msra.mxu0 0.0
  %152 = vmatprep.subr.mxu0 0.0
  %153 = vmatpush2.msra.mxu0 0.0
  %154 = vmatprep.subr.mxu0 0.0
  %155 = vmatpush2.msra.mxu0 0.0
  %156 = vmatprep.subr.mxu0 0.0
  %157 = vmatpush2.msra.mxu0 0.0
  %158 = vmatprep.subr.mxu0 0.0
  %159 = vmatpush2.msra.mxu0 0.0
  %160 = vmatprep.mubr.f32.mxu0 0.0
  %161 = vmatmul.mubr.f32.gmra.mxu0 %v72
  %v162 = vpop.f32.mrf.mxu0
  %v163 = vadd.f32 0.0, %v162
  %v164 = vpop.f32.mrf.mxu0
  %v165 = vadd.f32 0.0, %v164
  %166 = vmatprep.mubr.f32.mxu0 0.0
  %167 = vmatmul.mubr.f32.gmra.mxu0 %v75
  %v168 = vpop.f32.mrf.mxu0
  %v169 = vadd.f32 0.0, %v168
  %v170 = vpop.f32.mrf.mxu0
  %v171 = vadd.f32 0.0, %v170
  %172 = vmatprep.mubr.f32.mxu0 0.0
  %173 = vmatmul.mubr.f32.gmra.mxu0 %v78
  %v174 = vpop.f32.mrf.mxu0
  %v175 = vadd.f32 0.0, %v174
  %v176 = vpop.f32.mrf.mxu0
  %v177 = vadd.f32 0.0, %v176
  %178 = vmatprep.mubr.f32.mxu0 0.0
  %179 = vmatmul.mubr.f32.gmra.mxu0 %v81
  %v180 = vpop.f32.mrf.mxu0
  %v181 = vadd.f32 0.0, %v180
  %v182 = vpop.f32.mrf.mxu0
  %v183 = vadd.f32 0.0, %v182
  %184 = vdwg.mxu0
  %185 = vmatprep.subr.mxu0 0.0
  %186 = vmatpush1.msra.mxu0 0.0
  %187 = vmatprep.subr.mxu0 0.0
  %188 = vmatpush1.msra.mxu0 0.0
  %189 = vmatprep.subr.mxu0 0.0
  %190 = vmatpush1.msra.mxu0 0.0
  %191 = vmatprep.subr.mxu0 %v94
  %192 = vmatpush1.msra.mxu0 %v91
  %193 = vmatprep.subr.mxu0 %v65
  %194 = vmatpush1.msra.mxu0 %v64
  %195 = vmatprep.subr.mxu0 %v61
  %196 = vmatpush1.msra.mxu0 %v60
  %197 = vmatprep.subr.mxu0 %v57
  %198 = vmatpush1.msra.mxu0 %v56
  %199 = vmatprep.subr.mxu0 %v53
  %200 = vmatpush1.msra.mxu0 %v52
  %201 = vmatprep.subr.mxu0 %v49
  %202 = vmatpush1.msra.mxu0 %v48
  %203 = vmatprep.subr.mxu0 %v45
  %204 = vmatpush1.msra.mxu0 %v44
  %205 = vmatprep.subr.mxu0 %v41
  %206 = vmatpush1.msra.mxu0 %v40
  %207 = vmatprep.subr.mxu0 %v37
  %208 = vmatpush1.msra.mxu0 %v36
  %209 = vmatprep.subr.mxu0 %v33
  %210 = vmatpush1.msra.mxu0 %v32
  %211 = vmatprep.subr.mxu0 %v29
  %212 = vmatpush1.msra.mxu0 %v28
  %213 = vmatprep.subr.mxu0 %v25
  %214 = vmatpush1.msra.mxu0 %v24
  %215 = vmatprep.subr.mxu0 %v21
  %216 = vmatpush1.msra.mxu0 %v20
  %217 = vmatprep.subr.mxu0 0.0
  %218 = vmatpush2.msra.mxu0 0.0
  %219 = vmatprep.subr.mxu0 0.0
  %220 = vmatpush2.msra.mxu0 0.0
  %221 = vmatprep.subr.mxu0 0.0
  %222 = vmatpush2.msra.mxu0 0.0
  %223 = vmatprep.subr.mxu0 0.0
  %224 = vmatpush2.msra.mxu0 0.0
  %225 = vmatprep.subr.mxu0 0.0
  %226 = vmatpush2.msra.mxu0 0.0
  %227 = vmatprep.subr.mxu0 0.0
  %228 = vmatpush2.msra.mxu0 0.0
  %229 = vmatprep.subr.mxu0 0.0
  %230 = vmatpush2.msra.mxu0 0.0
  %231 = vmatprep.subr.mxu0 0.0
  %232 = vmatpush2.msra.mxu0 0.0
  %233 = vmatprep.subr.mxu0 0.0
  %234 = vmatpush2.msra.mxu0 0.0
  %235 = vmatprep.subr.mxu0 0.0
  %236 = vmatpush2.msra.mxu0 0.0
  %237 = vmatprep.subr.mxu0 0.0
  %238 = vmatpush2.msra.mxu0 0.0
  %239 = vmatprep.subr.mxu0 0.0
  %240 = vmatpush2.msra.mxu0 0.0
  %241 = vmatprep.subr.mxu0 0.0
  %242 = vmatpush2.msra.mxu0 0.0
  %243 = vmatprep.subr.mxu0 0.0
  %244 = vmatpush2.msra.mxu0 0.0
  %245 = vmatprep.subr.mxu0 0.0
  %246 = vmatpush2.msra.mxu0 0.0
  %247 = vmatprep.subr.mxu0 0.0
  %248 = vmatpush2.msra.mxu0 0.0
  %249 = vmatprep.mubr.f32.mxu0 0.0
  %250 = vmatmul.mubr.f32.gmra.mxu0 %v72
  %v251 = vpop.f32.mrf.mxu0
  %v252 = vadd.f32 0.0, %v251
  %v253 = vpop.f32.mrf.mxu0
  %v254 = vadd.f32 0.0, %v253
  %255 = vmatprep.mubr.f32.mxu0 0.0
  %256 = vmatmul.mubr.f32.gmra.mxu0 %v75
  %v257 = vpop.f32.mrf.mxu0
  %v258 = vadd.f32 0.0, %v257
  %v259 = vpop.f32.mrf.mxu0
  %v260 = vadd.f32 0.0, %v259
  %261 = vmatprep.mubr.f32.mxu0 0.0
  %262 = vmatmul.mubr.f32.gmra.mxu0 %v78
  %v263 = vpop.f32.mrf.mxu0
  %v264 = vadd.f32 0.0, %v263
  %v265 = vpop.f32.mrf.mxu0
  %v266 = vadd.f32 0.0, %v265
  %267 = vmatprep.mubr.f32.mxu0 0.0
  %268 = vmatmul.mubr.f32.gmra.mxu0 %v81
  %v269 = vpop.f32.mrf.mxu0
  %v270 = vadd.f32 0.0, %v269
  %v271 = vpop.f32.mrf.mxu0
  %v272 = vadd.f32 0.0, %v271
  %273 = vdwg.mxu0
  %v274 = vmax.f32 %v163, %v169
  %v275 = vmax.f32 %v165, %v171
  %v276 = vmax.f32 %v252, %v258
  %v277 = vmax.f32 %v254, %v260
  %v278 = vmax.f32 %v175, %v181
  %v279 = vmax.f32 %v177, %v183
  %v280 = vmax.f32 %v264, %v270
  %v281 = vmax.f32 %v266, %v272
  %v282 = vmax.f32 %v274, %v278
  %v283 = vmax.f32 %v275, %v279
  %v284 = vmax.f32 %v276, %v280
  %v285 = vmax.f32 %v277, %v281
  %v286 = vld [vmem:[%s2] sm:$0xff]
  %288 = vset.pattern.permute.xlu0 0
  %289 = vperm.xlu0 %288, %v286
  %v290 = vpop.permute.xlu0 %289
  %v292 = vadd.f32 %v282, %v290
  %v293 = vadd.f32 %v283, %v290
  %v294 = vadd.f32 %v284, %v290
  %v295 = vadd.f32 %v285, %v290
  %v296 = vtanh.pop %v292
  %v297 = vtanh.pop %v293
  %v298 = vtanh.pop %v294
  %v299 = vtanh.pop %v295
  %300 = vst [vmem:[%s3] sm:$0xff] %v296
  %301 = vst [vmem:[%s3 + $0x8] sm:$0xff] %v297
  %302 = vst [vmem:[%s3 + $0x10] sm:$0xff] %v298
  %303 = vst [vmem:[%s3 + $0x18] sm:$0xff] %v299
  // Predicated region
  $region14: #{lenet_forward.3} parent=0 // pred_check
    _
  $region15: #{lenet_forward.3} parent=0 // pred_check_branch
    %305 = sbr.rel (0) target = $region17
  $region16: #{lenet_forward.3} parent=0 // pred_region
    _
  $region17: #{lenet_forward.3} parent=0 // pred_fallthru
    _
  // Predicated region
  $region18: #{lenet_forward.3} parent=0 // pred_check
    _
  $region19: #{lenet_forward.3} parent=0 // pred_check_branch
    %307 = sbr.rel (0) target = $region21
  $region20: #{lenet_forward.3} parent=0 // pred_region
    _
  $region21: #{lenet_forward.3} parent=0 // pred_fallthru
    _

// kernel: lenet_forward.4
$region0: #{lenet_forward.4}
  #allocation0 [shape = 'u32[]', space=smem, size = 0x4, offset = 0x4, fixed_abs, tag = 'smem constant byte address 0x4 - core index']
  #allocation1 [shape = 'u32[144,128]{1,0:T(1,128)}', space=vmem, size = 0x12000, scoped, tag = 'internal scratch']
  %s0 = inlined_call_operand.vmem [shape: f32[600,128], index: 0, kind: input, shape index: {}]
  %s1 = inlined_call_operand.vmem [shape: f32[64,600], index: 1, kind: input, shape index: {}]
  %s2 = inlined_call_operand.vmem [shape: f32[16,1], index: 2, kind: input, shape index: {}]
  %s3 = inlined_call_operand.vmem [shape: f32[16,128], index: 3, kind: output, shape index: {}]
  %s4 = sld [smem:[#allocation0]]
  $region22: #{lenet_forward.4} parent=0
    _
  %s6 = ssub.s32 1, %s4
  %s7 = scalar_select 0, %s6, %s4
  // Predicated region
  $region2: #{lenet_forward.4} parent=0 // pred_check
    _
  $region3: #{lenet_forward.4} parent=0 // pred_check_branch
    %9 = sbr.rel (0) target = $region5
  $region4: #{lenet_forward.4} parent=0 // pred_region
    _
  $region5: #{lenet_forward.4} parent=0 // pred_fallthru
    _
  // Predicated region
  $region6: #{lenet_forward.4} parent=0 // pred_check
    _
  $region7: #{lenet_forward.4} parent=0 // pred_check_branch
    %11 = sbr.rel (0) target = $region9
  $region8: #{lenet_forward.4} parent=0 // pred_region
    _
  $region9: #{lenet_forward.4} parent=0 // pred_fallthru
    _
  // Predicated region
  $region10: #{lenet_forward.4} parent=0 // pred_check
    _
  $region11: #{lenet_forward.4} parent=0 // pred_check_branch
    %13 = sbr.rel (0) target = $region13
  $region12: #{lenet_forward.4} parent=0 // pred_region
    _
  $region13: #{lenet_forward.4} parent=0 // pred_fallthru
    _
  %v14 = vld [vmem:[%s1] sm:$0xff]
  %v15 = vld [vmem:[%s1 + $0x8] sm:$0xff]
  %v16 = vld [vmem:[%s1 + $0x10] sm:$0xff]
  %v17 = vld [vmem:[%s1 + $0x18] sm:$0xff]
  %v18 = vld [vmem:[%s1 + $0x20] sm:$0xff]
  %v19 = vld [vmem:[%s1 + $0x28] sm:$0xff]
  %v20 = vld [vmem:[%s1 + $0x30] sm:$0xff]
  %v21 = vld [vmem:[%s1 + $0x38] sm:$0xff]
  %v22 = vld [vmem:[%s1 + $0x40] sm:$0xff]
  %v23 = vld [vmem:[%s1 + $0x48] sm:$0xff]
  %v24 = vld [vmem:[%s1 + $0x50] sm:$0xff]
  %v25 = vld [vmem:[%s1 + $0x58] sm:$0xff]
  %v26 = vld [vmem:[%s1 + $0x60] sm:$0xff]
  %v27 = vld [vmem:[%s1 + $0x68] sm:$0xff]
  %v28 = vld [vmem:[%s1 + $0x70] sm:$0xff]
  %v29 = vld [vmem:[%s1 + $0x78] sm:$0xff]
  %v30 = vld [vmem:[%s1 + $0x80] sm:$0xff]
  %v31 = vld [vmem:[%s1 + $0x88] sm:$0xff]
  %v32 = vld [vmem:[%s1 + $0x90] sm:$0xff]
  %v33 = vld [vmem:[%s1 + $0x98] sm:$0xff]
  %v34 = vld [vmem:[%s1 + $0xa0] sm:$0xff]
  %v35 = vld [vmem:[%s1 + $0xa8] sm:$0xff]
  %v36 = vld [vmem:[%s1 + $0xb0] sm:$0xff]
  %v37 = vld [vmem:[%s1 + $0xb8] sm:$0xff]
  %v38 = vld [vmem:[%s1 + $0xc0] sm:$0xff]
  %v39 = vld [vmem:[%s1 + $0xc8] sm:$0xff]
  %v40 = vld [vmem:[%s1 + $0xd0] sm:$0xff]
  %v41 = vld [vmem:[%s1 + $0xd8] sm:$0xff]
  %v42 = vld [vmem:[%s1 + $0xe0] sm:$0xff]
  %v43 = vld [vmem:[%s1 + $0xe8] sm:$0xff]
  %v44 = vld [vmem:[%s1 + $0xf0] sm:$0xff]
  %v45 = vld [vmem:[%s1 + $0xf8] sm:$0xff]
  %v46 = vld [vmem:[%s1 + $0x100] sm:$0xff]
  %v47 = vld [vmem:[%s1 + $0x108] sm:$0xff]
  %v48 = vld [vmem:[%s1 + $0x110] sm:$0xff]
  %v49 = vld [vmem:[%s1 + $0x118] sm:$0xff]
  %v50 = vld [vmem:[%s1 + $0x120] sm:$0xff]
  %v51 = vld [vmem:[%s1 + $0x128] sm:$0xff]
  %v52 = vld [vmem:[%s1 + $0x130] sm:$0xff]
  %v53 = vld [vmem:[%s1 + $0x138] sm:$0xff]
  %v54 = vld [vmem:[%s0] sm:$0xff]
  %v55 = vld [vmem:[%s0 + $0x8] sm:$0xff]
  %v56 = vld [vmem:[%s0 + $0x10] sm:$0xff]
  %v57 = vld [vmem:[%s0 + $0x18] sm:$0xff]
  %v58 = vld [vmem:[%s0 + $0x20] sm:$0xff]
  %v59 = vld [vmem:[%s0 + $0x28] sm:$0xff]
  %v60 = vld [vmem:[%s0 + $0x30] sm:$0xff]
  %v61 = vld [vmem:[%s0 + $0x38] sm:$0xff]
  %v62 = vld [vmem:[%s0 + $0x40] sm:$0xff]
  %v63 = vld [vmem:[%s0 + $0x48] sm:$0xff]
  %v64 = vld [vmem:[%s0 + $0x50] sm:$0xff]
  %v65 = vld [vmem:[%s0 + $0x58] sm:$0xff]
  %v66 = vld [vmem:[%s0 + $0x60] sm:$0xff]
  %v67 = vld [vmem:[%s0 + $0x68] sm:$0xff]
  %v68 = vld [vmem:[%s0 + $0x70] sm:$0xff]
  %v69 = vld [vmem:[%s0 + $0x78] sm:$0xff]
  %v70 = vld [vmem:[%s0 + $0x80] sm:$0xff]
  %v71 = vld [vmem:[%s0 + $0x88] sm:$0xff]
  %v72 = vld [vmem:[%s0 + $0x90] sm:$0xff]
  %v73 = vld [vmem:[%s0 + $0x98] sm:$0xff]
  %v74 = vld [vmem:[%s0 + $0xa0] sm:$0xff]
  %v75 = vld [vmem:[%s0 + $0xa8] sm:$0xff]
  %v76 = vld [vmem:[%s0 + $0xb0] sm:$0xff]
  %v77 = vld [vmem:[%s0 + $0xb8] sm:$0xff]
  %v78 = vld [vmem:[%s0 + $0xc0] sm:$0xff]
  %v79 = vld [vmem:[%s0 + $0xc8] sm:$0xff]
  %v80 = vld [vmem:[%s0 + $0xd0] sm:$0xff]
  %v81 = vld [vmem:[%s0 + $0xd8] sm:$0xff]
  %v82 = vld [vmem:[%s0 + $0xe0] sm:$0xff]
  %v83 = vld [vmem:[%s0 + $0xe8] sm:$0xff]
  %v84 = vld [vmem:[%s0 + $0xf0] sm:$0xff]
  %v85 = vld [vmem:[%s0 + $0xf8] sm:$0xff]
  %v86 = vld [vmem:[%s0 + $0x100] sm:$0xff]
  %v87 = vld [vmem:[%s0 + $0x108] sm:$0xff]
  %v88 = vld [vmem:[%s0 + $0x110] sm:$0xff]
  %v89 = vld [vmem:[%s0 + $0x118] sm:$0xff]
  %v90 = vld [vmem:[%s0 + $0x120] sm:$0xff]
  %v91 = vld [vmem:[%s0 + $0x128] sm:$0xff]
  %v92 = vld [vmem:[%s0 + $0x130] sm:$0xff]
  %v93 = vld [vmem:[%s0 + $0x138] sm:$0xff]
  %v94 = vld [vmem:[%s0 + $0x140] sm:$0xff]
  %v95 = vld [vmem:[%s0 + $0x148] sm:$0xff]
  %v96 = vld [vmem:[%s0 + $0x150] sm:$0xff]
  %v97 = vld [vmem:[%s0 + $0x158] sm:$0xff]
  %v98 = vld [vmem:[%s0 + $0x160] sm:$0xff]
  %v99 = vld [vmem:[%s0 + $0x168] sm:$0xff]
  %v100 = vld [vmem:[%s0 + $0x170] sm:$0xff]
  %v101 = vld [vmem:[%s0 + $0x178] sm:$0xff]
  %v102 = vld [vmem:[%s0 + $0x180] sm:$0xff]
  %v103 = vld [vmem:[%s0 + $0x188] sm:$0xff]
  %v104 = vld [vmem:[%s0 + $0x190] sm:$0xff]
  %v105 = vld [vmem:[%s0 + $0x198] sm:$0xff]
  %v106 = vld [vmem:[%s0 + $0x1a0] sm:$0xff]
  %v107 = vld [vmem:[%s0 + $0x1a8] sm:$0xff]
  %v108 = vld [vmem:[%s0 + $0x1b0] sm:$0xff]
  %v109 = vld [vmem:[%s0 + $0x1b8] sm:$0xff]
  %v110 = vld [vmem:[%s0 + $0x1c0] sm:$0xff]
  %v111 = vld [vmem:[%s0 + $0x1c8] sm:$0xff]
  %v112 = vld [vmem:[%s0 + $0x1d0] sm:$0xff]
  %v113 = vld [vmem:[%s0 + $0x1d8] sm:$0xff]
  %v114 = vld [vmem:[%s0 + $0x1e0] sm:$0xff]
  %v115 = vld [vmem:[%s0 + $0x1e8] sm:$0xff]
  %v116 = vld [vmem:[%s0 + $0x1f0] sm:$0xff]
  %v117 = vld [vmem:[%s0 + $0x1f8] sm:$0xff]
  %v118 = vld [vmem:[%s0 + $0x200] sm:$0xff]
  %v119 = vld [vmem:[%s0 + $0x208] sm:$0xff]
  %v120 = vld [vmem:[%s0 + $0x210] sm:$0xff]
  %v121 = vld [vmem:[%s0 + $0x218] sm:$0xff]
  %v122 = vld [vmem:[%s0 + $0x220] sm:$0xff]
  %v123 = vld [vmem:[%s0 + $0x228] sm:$0xff]
  %v124 = vld [vmem:[%s0 + $0x230] sm:$0xff]
  %v125 = vld [vmem:[%s0 + $0x238] sm:$0xff]
  %v126 = vld [vmem:[%s0 + $0x240] sm:$0xff]
  %v127 = vld [vmem:[%s0 + $0x248] sm:$0xff]
  %v128 = vld [vmem:[%s0 + $0x250] sm:$0xff]
  %vm129 = vcmask 719872
  %v131 = vsel %vm129, %v18, 0
  %v134 = vsel %vm129, %v23, 0
  %v137 = vsel %vm129, %v28, 0
  %v140 = vsel %vm129, %v33, 0
  %v143 = vsel %vm129, %v38, 0
  %v146 = vsel %vm129, %v43, 0
  %v149 = vsel %vm129, %v48, 0
  %v152 = vsel %vm129, %v53, 0
  %154 = vmatprep.subr.mxu0 0.0
  %155 = vmatpush1.msra.mxu0 %v69
  %156 = vmatprep.subr.mxu0 0.0
  %157 = vmatpush1.msra.mxu0 %v68
  %158 = vmatprep.subr.mxu0 0.0
  %159 = vmatpush1.msra.mxu0 %v67
  %160 = vmatprep.subr.mxu0 0.0
  %161 = vmatpush1.msra.mxu0 %v66
  %162 = vmatprep.subr.mxu0 0.0
  %163 = vmatpush1.msra.mxu0 %v65
  %164 = vmatprep.subr.mxu0 0.0
  %165 = vmatpush1.msra.mxu0 %v64
  %166 = vmatprep.subr.mxu0 0.0
  %167 = vmatpush1.msra.mxu0 %v63
  %168 = vmatprep.subr.mxu0 0.0
  %169 = vmatpush1.msra.mxu0 %v62
  %170 = vmatprep.subr.mxu0 0.0
  %171 = vmatpush1.msra.mxu0 %v61
  %172 = vmatprep.subr.mxu0 0.0
  %173 = vmatpush1.msra.mxu0 %v60
  %174 = vmatprep.subr.mxu0 0.0
  %175 = vmatpush1.msra.mxu0 %v59
  %176 = vmatprep.subr.mxu0 0.0
  %177 = vmatpush1.msra.mxu0 %v58
  %178 = vmatprep.subr.mxu0 0.0
  %179 = vmatpush1.msra.mxu0 %v57
  %180 = vmatprep.subr.mxu0 0.0
  %181 = vmatpush1.msra.mxu0 %v56
  %182 = vmatprep.subr.mxu0 0.0
  %183 = vmatpush1.msra.mxu0 %v55
  %184 = vmatprep.subr.mxu0 0.0
  %185 = vmatpush1.msra.mxu0 %v54
  %186 = vmatprep.subr.mxu0 0.0
  %187 = vmatpush2.msra.mxu0 %v85
  %188 = vmatprep.subr.mxu0 0.0
  %189 = vmatpush2.msra.mxu0 %v84
  %190 = vmatprep.subr.mxu0 0.0
  %191 = vmatpush2.msra.mxu0 %v83
  %192 = vmatprep.subr.mxu0 0.0
  %193 = vmatpush2.msra.mxu0 %v82
  %194 = vmatprep.subr.mxu0 0.0
  %195 = vmatpush2.msra.mxu0 %v81
  %196 = vmatprep.subr.mxu0 0.0
  %197 = vmatpush2.msra.mxu0 %v80
  %198 = vmatprep.subr.mxu0 0.0
  %199 = vmatpush2.msra.mxu0 %v79
  %200 = vmatprep.subr.mxu0 0.0
  %201 = vmatpush2.msra.mxu0 %v78
  %202 = vmatprep.subr.mxu0 0.0
  %203 = vmatpush2.msra.mxu0 %v77
  %204 = vmatprep.subr.mxu0 0.0
  %205 = vmatpush2.msra.mxu0 %v76
  %206 = vmatprep.subr.mxu0 0.0
  %207 = vmatpush2.msra.mxu0 %v75
  %208 = vmatprep.subr.mxu0 0.0
  %209 = vmatpush2.msra.mxu0 %v74
  %210 = vmatprep.subr.mxu0 0.0
  %211 = vmatpush2.msra.mxu0 %v73
  %212 = vmatprep.subr.mxu0 0.0
  %213 = vmatpush2.msra.mxu0 %v72
  %214 = vmatprep.subr.mxu0 0.0
  %215 = vmatpush2.msra.mxu0 %v71
  %216 = vmatprep.subr.mxu0 0.0
  %217 = vmatpush2.msra.mxu0 %v70
  %218 = vmatprep.mubr.f32.mxu0 %v15
  %219 = vmatmul.mubr.f32.gmra.mxu0 %v14
  %v220 = vpop.f32.mrf.mxu0
  %v221 = vadd.f32 0.0, %v220
  %v222 = vpop.f32.mrf.mxu0
  %223 = vmatprep.mubr.f32.mxu0 %v20
  %224 = vmatmul.mubr.f32.gmra.mxu0 %v19
  %v225 = vpop.f32.mrf.mxu0
  %v226 = vadd.f32 0.0, %v225
  %v227 = vpop.f32.mrf.mxu0
  %228 = vmatprep.mubr.f32.mxu0 %v25
  %229 = vmatmul.mubr.f32.gmra.mxu0 %v24
  %v230 = vpop.f32.mrf.mxu0
  %v231 = vadd.f32 0.0, %v230
  %v232 = vpop.f32.mrf.mxu0
  %233 = vmatprep.mubr.f32.mxu0 %v30
  %234 = vmatmul.mubr.f32.gmra.mxu0 %v29
  %v235 = vpop.f32.mrf.mxu0
  %v236 = vadd.f32 0.0, %v235
  %v237 = vpop.f32.mrf.mxu0
  %238 = vmatprep.mubr.f32.mxu0 %v35
  %239 = vmatmul.mubr.f32.gmra.mxu0 %v34
  %v240 = vpop.f32.mrf.mxu0
  %v241 = vadd.f32 0.0, %v240
  %v242 = vpop.f32.mrf.mxu0
  %243 = vmatprep.mubr.f32.mxu0 %v40
  %244 = vmatmul.mubr.f32.gmra.mxu0 %v39
  %v245 = vpop.f32.mrf.mxu0
  %v246 = vadd.f32 0.0, %v245
  %v247 = vpop.f32.mrf.mxu0
  %248 = vmatprep.mubr.f32.mxu0 %v45
  %249 = vmatmul.mubr.f32.gmra.mxu0 %v44
  %v250 = vpop.f32.mrf.mxu0
  %v251 = vadd.f32 0.0, %v250
  %v252 = vpop.f32.mrf.mxu0
  %253 = vmatprep.mubr.f32.mxu0 %v50
  %254 = vmatmul.mubr.f32.gmra.mxu0 %v49
  %v255 = vpop.f32.mrf.mxu0
  %v256 = vadd.f32 0.0, %v255
  %v257 = vpop.f32.mrf.mxu0
  %258 = vdwg.mxu0
  %259 = vmatprep.subr.mxu0 0.0
  %260 = vmatpush1.msra.mxu0 %v101
  %261 = vmatprep.subr.mxu0 0.0
  %262 = vmatpush1.msra.mxu0 %v100
  %263 = vmatprep.subr.mxu0 0.0
  %264 = vmatpush1.msra.mxu0 %v99
  %265 = vmatprep.subr.mxu0 0.0
  %266 = vmatpush1.msra.mxu0 %v98
  %267 = vmatprep.subr.mxu0 0.0
  %268 = vmatpush1.msra.mxu0 %v97
  %269 = vmatprep.subr.mxu0 0.0
  %270 = vmatpush1.msra.mxu0 %v96
  %271 = vmatprep.subr.mxu0 0.0
  %272 = vmatpush1.msra.mxu0 %v95
  %273 = vmatprep.subr.mxu0 0.0
  %274 = vmatpush1.msra.mxu0 %v94
  %275 = vmatprep.subr.mxu0 0.0
  %276 = vmatpush1.msra.mxu0 %v93
  %277 = vmatprep.subr.mxu0 0.0
  %278 = vmatpush1.msra.mxu0 %v92
  %279 = vmatprep.subr.mxu0 0.0
  %280 = vmatpush1.msra.mxu0 %v91
  %281 = vmatprep.subr.mxu0 0.0
  %282 = vmatpush1.msra.mxu0 %v90
  %283 = vmatprep.subr.mxu0 0.0
  %284 = vmatpush1.msra.mxu0 %v89
  %285 = vmatprep.subr.mxu0 0.0
  %286 = vmatpush1.msra.mxu0 %v88
  %287 = vmatprep.subr.mxu0 0.0
  %288 = vmatpush1.msra.mxu0 %v87
  %289 = vmatprep.subr.mxu0 0.0
  %290 = vmatpush1.msra.mxu0 %v86
  %291 = vmatprep.subr.mxu0 0.0
  %292 = vmatpush2.msra.mxu0 %v117
  %293 = vmatprep.subr.mxu0 0.0
  %294 = vmatpush2.msra.mxu0 %v116
  %295 = vmatprep.subr.mxu0 0.0
  %296 = vmatpush2.msra.mxu0 %v115
  %297 = vmatprep.subr.mxu0 0.0
  %298 = vmatpush2.msra.mxu0 %v114
  %299 = vmatprep.subr.mxu0 0.0
  %300 = vmatpush2.msra.mxu0 %v113
  %301 = vmatprep.subr.mxu0 0.0
  %302 = vmatpush2.msra.mxu0 %v112
  %303 = vmatprep.subr.mxu0 0.0
  %304 = vmatpush2.msra.mxu0 %v111
  %305 = vmatprep.subr.mxu0 0.0
  %306 = vmatpush2.msra.mxu0 %v110
  %307 = vmatprep.subr.mxu0 0.0
  %308 = vmatpush2.msra.mxu0 %v109
  %309 = vmatprep.subr.mxu0 0.0
  %310 = vmatpush2.msra.mxu0 %v108
  %311 = vmatprep.subr.mxu0 0.0
  %312 = vmatpush2.msra.mxu0 %v107
  %313 = vmatprep.subr.mxu0 0.0
  %314 = vmatpush2.msra.mxu0 %v106
  %315 = vmatprep.subr.mxu0 0.0
  %316 = vmatpush2.msra.mxu0 %v105
  %317 = vmatprep.subr.mxu0 0.0
  %318 = vmatpush2.msra.mxu0 %v104
  %319 = vmatprep.subr.mxu0 0.0
  %320 = vmatpush2.msra.mxu0 %v103
  %321 = vmatprep.subr.mxu0 0.0
  %322 = vmatpush2.msra.mxu0 %v102
  %323 = vmatprep.mubr.f32.mxu0 %v17
  %324 = vmatmul.mubr.f32.gmra.mxu0 %v16
  %v325 = vpop.f32.mrf.mxu0
  %v326 = vadd.f32 %v221, %v325
  %v327 = vpop.f32.mrf.mxu0
  %328 = vmatprep.mubr.f32.mxu0 %v22
  %329 = vmatmul.mubr.f32.gmra.mxu0 %v21
  %v330 = vpop.f32.mrf.mxu0
  %v331 = vadd.f32 %v226, %v330
  %v332 = vpop.f32.mrf.mxu0
  %333 = vmatprep.mubr.f32.mxu0 %v27
  %334 = vmatmul.mubr.f32.gmra.mxu0 %v26
  %v335 = vpop.f32.mrf.mxu0
  %v336 = vadd.f32 %v231, %v335
  %v337 = vpop.f32.mrf.mxu0
  %338 = vmatprep.mubr.f32.mxu0 %v32
  %339 = vmatmul.mubr.f32.gmra.mxu0 %v31
  %v340 = vpop.f32.mrf.mxu0
  %v341 = vadd.f32 %v236, %v340
  %v342 = vpop.f32.mrf.mxu0
  %343 = vmatprep.mubr.f32.mxu0 %v37
  %344 = vmatmul.mubr.f32.gmra.mxu0 %v36
  %v345 = vpop.f32.mrf.mxu0
  %v346 = vadd.f32 %v241, %v345
  %v347 = vpop.f32.mrf.mxu0
  %348 = vmatprep.mubr.f32.mxu0 %v42
  %349 = vmatmul.mubr.f32.gmra.mxu0 %v41
  %v350 = vpop.f32.mrf.mxu0
  %v351 = vadd.f32 %v246, %v350
  %v352 = vpop.f32.mrf.mxu0
  %353 = vmatprep.mubr.f32.mxu0 %v47
  %354 = vmatmul.mubr.f32.gmra.mxu0 %v46
  %v355 = vpop.f32.mrf.mxu0
  %v356 = vadd.f32 %v251, %v355
  %v357 = vpop.f32.mrf.mxu0
  %358 = vmatprep.mubr.f32.mxu0 %v52
  %359 = vmatmul.mubr.f32.gmra.mxu0 %v51
  %v360 = vpop.f32.mrf.mxu0
  %v361 = vadd.f32 %v256, %v360
  %v362 = vpop.f32.mrf.mxu0
  %363 = vdwg.mxu0
  %364 = vmatprep.subr.mxu0 0.0
  %365 = vmatpush1.msra.mxu0 0.0
  %366 = vmatprep.subr.mxu0 0.0
  %367 = vmatpush1.msra.mxu0 0.0
  %368 = vmatprep.subr.mxu0 0.0
  %369 = vmatpush1.msra.mxu0 0.0
  %370 = vmatprep.subr.mxu0 0.0
  %371 = vmatpush1.msra.mxu0 0.0
  %372 = vmatprep.subr.mxu0 0.0
  %373 = vmatpush1.msra.mxu0 0.0
  %374 = vmatprep.subr.mxu0 0.0
  %375 = vmatpush1.msra.mxu0 %v128
  %376 = vmatprep.subr.mxu0 0.0
  %377 = vmatpush1.msra.mxu0 %v127
  %378 = vmatprep.subr.mxu0 0.0
  %379 = vmatpush1.msra.mxu0 %v126
  %380 = vmatprep.subr.mxu0 0.0
  %381 = vmatpush1.msra.mxu0 %v125
  %382 = vmatprep.subr.mxu0 0.0
  %383 = vmatpush1.msra.mxu0 %v124
  %384 = vmatprep.subr.mxu0 0.0
  %385 = vmatpush1.msra.mxu0 %v123
  %386 = vmatprep.subr.mxu0 0.0
  %387 = vmatpush1.msra.mxu0 %v122
  %388 = vmatprep.subr.mxu0 0.0
  %389 = vmatpush1.msra.mxu0 %v121
  %390 = vmatprep.subr.mxu0 0.0
  %391 = vmatpush1.msra.mxu0 %v120
  %392 = vmatprep.subr.mxu0 0.0
  %393 = vmatpush1.msra.mxu0 %v119
  %394 = vmatprep.subr.mxu0 0.0
  %395 = vmatpush1.msra.mxu0 %v118
  %396 = vmatprep.subr.mxu0 0.0
  %397 = vmatpush2.msra.mxu0 0.0
  %398 = vmatprep.subr.mxu0 0.0
  %399 = vmatpush2.msra.mxu0 0.0
  %400 = vmatprep.subr.mxu0 0.0
  %401 = vmatpush2.msra.mxu0 0.0
  %402 = vmatprep.subr.mxu0 0.0
  %403 = vmatpush2.msra.mxu0 0.0
  %404 = vmatprep.subr.mxu0 0.0
  %405 = vmatpush2.msra.mxu0 0.0
  %406 = vmatprep.subr.mxu0 0.0
  %407 = vmatpush2.msra.mxu0 0.0
  %408 = vmatprep.subr.mxu0 0.0
  %409 = vmatpush2.msra.mxu0 0.0
  %410 = vmatprep.subr.mxu0 0.0
  %411 = vmatpush2.msra.mxu0 0.0
  %412 = vmatprep.subr.mxu0 0.0
  %413 = vmatpush2.msra.mxu0 0.0
  %414 = vmatprep.subr.mxu0 0.0
  %415 = vmatpush2.msra.mxu0 0.0
  %416 = vmatprep.subr.mxu0 0.0
  %417 = vmatpush2.msra.mxu0 0.0
  %418 = vmatprep.subr.mxu0 0.0
  %419 = vmatpush2.msra.mxu0 0.0
  %420 = vmatprep.subr.mxu0 0.0
  %421 = vmatpush2.msra.mxu0 0.0
  %422 = vmatprep.subr.mxu0 0.0
  %423 = vmatpush2.msra.mxu0 0.0
  %424 = vmatprep.subr.mxu0 0.0
  %425 = vmatpush2.msra.mxu0 0.0
  %426 = vmatprep.subr.mxu0 0.0
  %427 = vmatpush2.msra.mxu0 0.0
  %428 = vmatprep.mubr.f32.mxu0 0.0
  %429 = vmatmul.mubr.f32.gmra.mxu0 %v131
  %v430 = vpop.f32.mrf.mxu0
  %v431 = vadd.f32 %v326, %v430
  %v432 = vpop.f32.mrf.mxu0
  %433 = vmatprep.mubr.f32.mxu0 0.0
  %434 = vmatmul.mubr.f32.gmra.mxu0 %v134
  %v435 = vpop.f32.mrf.mxu0
  %v436 = vadd.f32 %v331, %v435
  %v437 = vpop.f32.mrf.mxu0
  %438 = vmatprep.mubr.f32.mxu0 0.0
  %439 = vmatmul.mubr.f32.gmra.mxu0 %v137
  %v440 = vpop.f32.mrf.mxu0
  %v441 = vadd.f32 %v336, %v440
  %v442 = vpop.f32.mrf.mxu0
  %443 = vmatprep.mubr.f32.mxu0 0.0
  %444 = vmatmul.mubr.f32.gmra.mxu0 %v140
  %v445 = vpop.f32.mrf.mxu0
  %v446 = vadd.f32 %v341, %v445
  %v447 = vpop.f32.mrf.mxu0
  %448 = vmatprep.mubr.f32.mxu0 0.0
  %449 = vmatmul.mubr.f32.gmra.mxu0 %v143
  %v450 = vpop.f32.mrf.mxu0
  %v451 = vadd.f32 %v346, %v450
  %v452 = vpop.f32.mrf.mxu0
  %453 = vmatprep.mubr.f32.mxu0 0.0
  %454 = vmatmul.mubr.f32.gmra.mxu0 %v146
  %v455 = vpop.f32.mrf.mxu0
  %v456 = vadd.f32 %v351, %v455
  %v457 = vpop.f32.mrf.mxu0
  %458 = vmatprep.mubr.f32.mxu0 0.0
  %459 = vmatmul.mubr.f32.gmra.mxu0 %v149
  %v460 = vpop.f32.mrf.mxu0
  %v461 = vadd.f32 %v356, %v460
  %v462 = vpop.f32.mrf.mxu0
  %463 = vmatprep.mubr.f32.mxu0 0.0
  %464 = vmatmul.mubr.f32.gmra.mxu0 %v152
  %v465 = vpop.f32.mrf.mxu0
  %v466 = vadd.f32 %v361, %v465
  %v467 = vpop.f32.mrf.mxu0
  %468 = vdwg.mxu0
  %v469 = vmax.f32 %v431, %v441
  %v470 = vmax.f32 %v436, %v446
  %v471 = vmax.f32 %v451, %v461
  %v472 = vmax.f32 %v456, %v466
  %v473 = vmax.f32 %v469, %v471
  %v474 = vmax.f32 %v470, %v472
  %v475 = vld [vmem:[%s2] sm:$0xff]
  %v476 = vld [vmem:[%s2 + $0x8] sm:$0xff]
  %478 = vset.pattern.permute.xlu0 0
  %479 = vperm.xlu0 %478, %v475
  %v480 = vpop.permute.xlu0 %479
  %483 = vset.pattern.permute.xlu0 0
  %484 = vperm.xlu0 %483, %v476
  %v485 = vpop.permute.xlu0 %484
  %v487 = vadd.f32 %v473, %v480
  %v488 = vadd.f32 %v474, %v485
  %v489 = vtanh.pop %v487
  %v490 = vtanh.pop %v488
  %491 = vst [vmem:[%s3] sm:$0xff] %v489
  %492 = vst [vmem:[%s3 + $0x8] sm:$0xff] %v490
  // Predicated region
  $region14: #{lenet_forward.4} parent=0 // pred_check
    _
  $region15: #{lenet_forward.4} parent=0 // pred_check_branch
    %494 = sbr.rel (0) target = $region17
  $region16: #{lenet_forward.4} parent=0 // pred_region
    _
  $region17: #{lenet_forward.4} parent=0 // pred_fallthru
    _
  // Predicated region
  $region18: #{lenet_forward.4} parent=0 // pred_check
    _
  $region19: #{lenet_forward.4} parent=0 // pred_check_branch
    %496 = sbr.rel (0) target = $region21
  $region20: #{lenet_forward.4} parent=0 // pred_region
    _
  $region21: #{lenet_forward.4} parent=0 // pred_fallthru
    _

// kernel: lenet_forward.5
$region0: #{lenet_forward.5}
  #allocation0 [shape = 'u32[]', space=smem, size = 0x4, offset = 0x4, fixed_abs, tag = 'smem constant byte address 0x4 - core index']
  #allocation1 [shape = 'u32[144,128]{1,0:T(1,128)}', space=vmem, size = 0x12000, scoped, tag = 'internal scratch']
  %s0 = inlined_call_operand.vmem [shape: f32[8,784], index: 0, kind: input, shape index: {}]
  %s1 = inlined_call_operand.vmem [shape: f32[784,128], index: 1, kind: input, shape index: {}]
  %s2 = inlined_call_operand.vmem [shape: f32[1,128], index: 2, kind: input, shape index: {}]
  %s3 = inlined_call_operand.vmem [shape: f32[128,128], index: 3, kind: input, shape index: {}]
  %s4 = inlined_call_operand.vmem [shape: f32[1,128], index: 4, kind: input, shape index: {}]
  %s5 = inlined_call_operand.vmem [shape: f32[8,128], index: 5, kind: output, shape index: {}]
  %s6 = sld [smem:[#allocation0]]
  $region30: #{lenet_forward.5} parent=0
    _
  %s8 = ssub.s32 1, %s6
  %s9 = scalar_select 0, %s8, %s6
  // Predicated region
  $region2: #{lenet_forward.5} parent=0 // pred_check
    _
  $region3: #{lenet_forward.5} parent=0 // pred_check_branch
    %11 = sbr.rel (0) target = $region5
  $region4: #{lenet_forward.5} parent=0 // pred_region
    _
  $region5: #{lenet_forward.5} parent=0 // pred_fallthru
    _
  // Predicated region
  $region6: #{lenet_forward.5} parent=0 // pred_check
    _
  $region7: #{lenet_forward.5} parent=0 // pred_check_branch
    %13 = sbr.rel (0) target = $region9
  $region8: #{lenet_forward.5} parent=0 // pred_region
    _
  $region9: #{lenet_forward.5} parent=0 // pred_fallthru
    _
  // Predicated region
  $region10: #{lenet_forward.5} parent=0 // pred_check
    _
  $region11: #{lenet_forward.5} parent=0 // pred_check_branch
    %15 = sbr.rel (0) target = $region13
  $region12: #{lenet_forward.5} parent=0 // pred_region
    _
  $region13: #{lenet_forward.5} parent=0 // pred_fallthru
    _
  // Predicated region
  $region14: #{lenet_forward.5} parent=0 // pred_check
    _
  $region15: #{lenet_forward.5} parent=0 // pred_check_branch
    %17 = sbr.rel (0) target = $region17
  $region16: #{lenet_forward.5} parent=0 // pred_region
    _
  $region17: #{lenet_forward.5} parent=0 // pred_fallthru
    _
  // Predicated region
  $region18: #{lenet_forward.5} parent=0 // pred_check
    _
  $region19: #{lenet_forward.5} parent=0 // pred_check_branch
    %19 = sbr.rel (0) target = $region21
  $region20: #{lenet_forward.5} parent=0 // pred_region
    _
  $region21: #{lenet_forward.5} parent=0 // pred_fallthru
    _
  %v20 = vld [vmem:[%s0] sm:$0xff]
  %v21 = vld [vmem:[%s0 + $0x8] sm:$0xff]
  %v22 = vld [vmem:[%s0 + $0x10] sm:$0xff]
  %v23 = vld [vmem:[%s0 + $0x18] sm:$0xff]
  %v24 = vld [vmem:[%s0 + $0x20] sm:$0xff]
  %v25 = vld [vmem:[%s0 + $0x28] sm:$0xff]
  %v26 = vld [vmem:[%s0 + $0x30] sm:$0xff]
  %v27 = vld [vmem:[%s1] sm:$0xff]
  %v28 = vld [vmem:[%s1 + $0x8] sm:$0xff]
  %v29 = vld [vmem:[%s1 + $0x10] sm:$0xff]
  %v30 = vld [vmem:[%s1 + $0x18] sm:$0xff]
  %v31 = vld [vmem:[%s1 + $0x20] sm:$0xff]
  %v32 = vld [vmem:[%s1 + $0x28] sm:$0xff]
  %v33 = vld [vmem:[%s1 + $0x30] sm:$0xff]
  %v34 = vld [vmem:[%s1 + $0x38] sm:$0xff]
  %v35 = vld [vmem:[%s1 + $0x40] sm:$0xff]
  %v36 = vld [vmem:[%s1 + $0x48] sm:$0xff]
  %v37 = vld [vmem:[%s1 + $0x50] sm:$0xff]
  %v38 = vld [vmem:[%s1 + $0x58] sm:$0xff]
  %v39 = vld [vmem:[%s1 + $0x60] sm:$0xff]
  %v40 = vld [vmem:[%s1 + $0x68] sm:$0xff]
  %v41 = vld [vmem:[%s1 + $0x70] sm:$0xff]
  %v42 = vld [vmem:[%s1 + $0x78] sm:$0xff]
  %v43 = vld [vmem:[%s1 + $0x80] sm:$0xff]
  %v44 = vld [vmem:[%s1 + $0x88] sm:$0xff]
  %v45 = vld [vmem:[%s1 + $0x90] sm:$0xff]
  %v46 = vld [vmem:[%s1 + $0x98] sm:$0xff]
  %v47 = vld [vmem:[%s1 + $0xa0] sm:$0xff]
  %v48 = vld [vmem:[%s1 + $0xa8] sm:$0xff]
  %v49 = vld [vmem:[%s1 + $0xb0] sm:$0xff]
  %v50 = vld [vmem:[%s1 + $0xb8] sm:$0xff]
  %v51 = vld [vmem:[%s1 + $0xc0] sm:$0xff]
  %v52 = vld [vmem:[%s1 + $0xc8] sm:$0xff]
  %v53 = vld [vmem:[%s1 + $0xd0] sm:$0xff]
  %v54 = vld [vmem:[%s1 + $0xd8] sm:$0xff]
  %v55 = vld [vmem:[%s1 + $0xe0] sm:$0xff]
  %v56 = vld [vmem:[%s1 + $0xe8] sm:$0xff]
  %v57 = vld [vmem:[%s1 + $0xf0] sm:$0xff]
  %v58 = vld [vmem:[%s1 + $0xf8] sm:$0xff]
  %v59 = vld [vmem:[%s1 + $0x100] sm:$0xff]
  %v60 = vld [vmem:[%s1 + $0x108] sm:$0xff]
  %v61 = vld [vmem:[%s1 + $0x110] sm:$0xff]
  %v62 = vld [vmem:[%s1 + $0x118] sm:$0xff]
  %v63 = vld [vmem:[%s1 + $0x120] sm:$0xff]
  %v64 = vld [vmem:[%s1 + $0x128] sm:$0xff]
  %v65 = vld [vmem:[%s1 + $0x130] sm:$0xff]
  %v66 = vld [vmem:[%s1 + $0x138] sm:$0xff]
  %v67 = vld [vmem:[%s1 + $0x140] sm:$0xff]
  %v68 = vld [vmem:[%s1 + $0x148] sm:$0xff]
  %v69 = vld [vmem:[%s1 + $0x150] sm:$0xff]
  %v70 = vld [vmem:[%s1 + $0x158] sm:$0xff]
  %v71 = vld [vmem:[%s1 + $0x160] sm:$0xff]
  %v72 = vld [vmem:[%s1 + $0x168] sm:$0xff]
  %v73 = vld [vmem:[%s1 + $0x170] sm:$0xff]
  %v74 = vld [vmem:[%s1 + $0x178] sm:$0xff]
  %v75 = vld [vmem:[%s1 + $0x180] sm:$0xff]
  %v76 = vld [vmem:[%s1 + $0x188] sm:$0xff]
  %v77 = vld [vmem:[%s1 + $0x190] sm:$0xff]
  %v78 = vld [vmem:[%s1 + $0x198] sm:$0xff]
  %v79 = vld [vmem:[%s1 + $0x1a0] sm:$0xff]
  %v80 = vld [vmem:[%s1 + $0x1a8] sm:$0xff]
  %v81 = vld [vmem:[%s1 + $0x1b0] sm:$0xff]
  %v82 = vld [vmem:[%s1 + $0x1b8] sm:$0xff]
  %v83 = vld [vmem:[%s1 + $0x1c0] sm:$0xff]
  %v84 = vld [vmem:[%s1 + $0x1c8] sm:$0xff]
  %v85 = vld [vmem:[%s1 + $0x1d0] sm:$0xff]
  %v86 = vld [vmem:[%s1 + $0x1d8] sm:$0xff]
  %v87 = vld [vmem:[%s1 + $0x1e0] sm:$0xff]
  %v88 = vld [vmem:[%s1 + $0x1e8] sm:$0xff]
  %v89 = vld [vmem:[%s1 + $0x1f0] sm:$0xff]
  %v90 = vld [vmem:[%s1 + $0x1f8] sm:$0xff]
  %v91 = vld [vmem:[%s1 + $0x200] sm:$0xff]
  %v92 = vld [vmem:[%s1 + $0x208] sm:$0xff]
  %v93 = vld [vmem:[%s1 + $0x210] sm:$0xff]
  %v94 = vld [vmem:[%s1 + $0x218] sm:$0xff]
  %v95 = vld [vmem:[%s1 + $0x220] sm:$0xff]
  %v96 = vld [vmem:[%s1 + $0x228] sm:$0xff]
  %v97 = vld [vmem:[%s1 + $0x230] sm:$0xff]
  %v98 = vld [vmem:[%s1 + $0x238] sm:$0xff]
  %v99 = vld [vmem:[%s1 + $0x240] sm:$0xff]
  %v100 = vld [vmem:[%s1 + $0x248] sm:$0xff]
  %v101 = vld [vmem:[%s1 + $0x250] sm:$0xff]
  %v102 = vld [vmem:[%s1 + $0x258] sm:$0xff]
  %v103 = vld [vmem:[%s1 + $0x260] sm:$0xff]
  %v104 = vld [vmem:[%s1 + $0x268] sm:$0xff]
  %v105 = vld [vmem:[%s1 + $0x270] sm:$0xff]
  %v106 = vld [vmem:[%s1 + $0x278] sm:$0xff]
  %v107 = vld [vmem:[%s1 + $0x280] sm:$0xff]
  %v108 = vld [vmem:[%s1 + $0x288] sm:$0xff]
  %v109 = vld [vmem:[%s1 + $0x290] sm:$0xff]
  %v110 = vld [vmem:[%s1 + $0x298] sm:$0xff]
  %v111 = vld [vmem:[%s1 + $0x2a0] sm:$0xff]
  %v112 = vld [vmem:[%s1 + $0x2a8] sm:$0xff]
  %v113 = vld [vmem:[%s1 + $0x2b0] sm:$0xff]
  %v114 = vld [vmem:[%s1 + $0x2b8] sm:$0xff]
  %v115 = vld [vmem:[%s1 + $0x2c0] sm:$0xff]
  %v116 = vld [vmem:[%s1 + $0x2c8] sm:$0xff]
  %v117 = vld [vmem:[%s1 + $0x2d0] sm:$0xff]
  %v118 = vld [vmem:[%s1 + $0x2d8] sm:$0xff]
  %v119 = vld [vmem:[%s1 + $0x2e0] sm:$0xff]
  %v120 = vld [vmem:[%s1 + $0x2e8] sm:$0xff]
  %v121 = vld [vmem:[%s1 + $0x2f0] sm:$0xff]
  %v122 = vld [vmem:[%s1 + $0x2f8] sm:$0xff]
  %v123 = vld [vmem:[%s1 + $0x300] sm:$0xff]
  %v124 = vld [vmem:[%s1 + $0x308] sm:$0xff]
  %v125 = vld [vmem:[%s2] sm:$0x1]
  %v127 = vlaneseq
  %v128 = vshrl.u32 %v127, 7
  %v129 = vsub.s32 0, %v128
  %v130 = vrot.slane %v125, %v129
  %vm132 = vcmask 130048
  %v134 = vsel %vm132, %v26, 0
  %136 = vmatprep.subr.mxu0 0.0
  %137 = vmatpush1.msra.mxu0 %v42
  %138 = vmatprep.subr.mxu0 0.0
  %139 = vmatpush1.msra.mxu0 %v41
  %140 = vmatprep.subr.mxu0 0.0
  %141 = vmatpush1.msra.mxu0 %v40
  %142 = vmatprep.subr.mxu0 0.0
  %143 = vmatpush1.msra.mxu0 %v39
  %144 = vmatprep.subr.mxu0 0.0
  %145 = vmatpush1.msra.mxu0 %v38
  %146 = vmatprep.subr.mxu0 0.0
  %147 = vmatpush1.msra.mxu0 %v37
  %148 = vmatprep.subr.mxu0 0.0
  %149 = vmatpush1.msra.mxu0 %v36
  %150 = vmatprep.subr.mxu0 0.0
  %151 = vmatpush1.msra.mxu0 %v35
  %152 = vmatprep.subr.mxu0 0.0
  %153 = vmatpush1.msra.mxu0 %v34
  %154 = vmatprep.subr.mxu0 0.0
  %155 = vmatpush1.msra.mxu0 %v33
  %156 = vmatprep.subr.mxu0 0.0
  %157 = vmatpush1.msra.mxu0 %v32
  %158 = vmatprep.subr.mxu0 0.0
  %159 = vmatpush1.msra.mxu0 %v31
  %160 = vmatprep.subr.mxu0 0.0
  %161 = vmatpush1.msra.mxu0 %v30
  %162 = vmatprep.subr.mxu0 0.0
  %163 = vmatpush1.msra.mxu0 %v29
  %164 = vmatprep.subr.mxu0 0.0
  %165 = vmatpush1.msra.mxu0 %v28
  %166 = vmatprep.subr.mxu0 0.0
  %167 = vmatpush1.msra.mxu0 %v27
  %168 = vmatprep.subr.mxu0 0.0
  %169 = vmatpush2.msra.mxu0 %v58
  %170 = vmatprep.subr.mxu0 0.0
  %171 = vmatpush2.msra.mxu0 %v57
  %172 = vmatprep.subr.mxu0 0.0
  %173 = vmatpush2.msra.mxu0 %v56
  %174 = vmatprep.subr.mxu0 0.0
  %175 = vmatpush2.msra.mxu0 %v55
  %176 = vmatprep.subr.mxu0 0.0
  %177 = vmatpush2.msra.mxu0 %v54
  %178 = vmatprep.subr.mxu0 0.0
  %179 = vmatpush2.msra.mxu0 %v53
  %180 = vmatprep.subr.mxu0 0.0
  %181 = vmatpush2.msra.mxu0 %v52
  %182 = vmatprep.subr.mxu0 0.0
  %183 = vmatpush2.msra.mxu0 %v51
  %184 = vmatprep.subr.mxu0 0.0
  %185 = vmatpush2.msra.mxu0 %v50
  %186 = vmatprep.subr.mxu0 0.0
  %187 = vmatpush2.msra.mxu0 %v49
  %188 = vmatprep.subr.mxu0 0.0
  %189 = vmatpush2.msra.mxu0 %v48
  %190 = vmatprep.subr.mxu0 0.0
  %191 = vmatpush2.msra.mxu0 %v47
  %192 = vmatprep.subr.mxu0 0.0
  %193 = vmatpush2.msra.mxu0 %v46
  %194 = vmatprep.subr.mxu0 0.0
  %195 = vmatpush2.msra.mxu0 %v45
  %196 = vmatprep.subr.mxu0 0.0
  %197 = vmatpush2.msra.mxu0 %v44
  %198 = vmatprep.subr.mxu0 0.0
  %199 = vmatpush2.msra.mxu0 %v43
  %200 = vmatprep.mubr.f32.mxu0 %v21
  %201 = vmatmul.mubr.f32.gmra.mxu0 %v20
  %v202 = vpop.f32.mrf.mxu0
  %v203 = vadd.f32 %v130, %v202
  %v204 = vpop.f32.mrf.mxu0
  %205 = vdwg.mxu0
  %206 = vmatprep.subr.mxu0 0.0
  %207 = vmatpush1.msra.mxu0 %v74
  %208 = vmatprep.subr.mxu0 0.0
  %209 = vmatpush1.msra.mxu0 %v73
  %210 = vmatprep.subr.mxu0 0.0
  %211 = vmatpush1.msra.mxu0 %v72
  %212 = vmatprep.subr.mxu0 0.0
  %213 = vmatpush1.msra.mxu0 %v71
  %214 = vmatprep.subr.mxu0 0.0
  %215 = vmatpush1.msra.mxu0 %v70
  %216 = vmatprep.subr.mxu0 0.0
  %217 = vmatpush1.msra.mxu0 %v69
  %218 = vmatprep.subr.mxu0 0.0
  %219 = vmatpush1.msra.mxu0 %v68
  %220 = vmatprep.subr.mxu0 0.0
  %221 = vmatpush1.msra.mxu0 %v67
  %222 = vmatprep.subr.mxu0 0.0
  %223 = vmatpush1.msra.mxu0 %v66
  %224 = vmatprep.subr.mxu0 0.0
  %225 = vmatpush1.msra.mxu0 %v65
  %226 = vmatprep.subr.mxu0 0.0
  %227 = vmatpush1.msra.mxu0 %v64
  %228 = vmatprep.subr.mxu0 0.0
  %229 = vmatpush1.msra.mxu0 %v63
  %230 = vmatprep.subr.mxu0 0.0
  %231 = vmatpush1.msra.mxu0 %v62
  %232 = vmatprep.subr.mxu0 0.0
  %233 = vmatpush1.msra.mxu0 %v61
  %234 = vmatprep.subr.mxu0 0.0
  %235 = vmatpush1.msra.mxu0 %v60
  %236 = vmatprep.subr.mxu0 0.0
  %237 = vmatpush1.msra.mxu0 %v59
  %238 = vmatprep.subr.mxu0 0.0
  %239 = vmatpush2.msra.mxu0 %v90
  %240 = vmatprep.subr.mxu0 0.0
  %241 = vmatpush2.msra.mxu0 %v89
  %242 = vmatprep.subr.mxu0 0.0
  %243 = vmatpush2.msra.mxu0 %v88
  %244 = vmatprep.subr.mxu0 0.0
  %245 = vmatpush2.msra.mxu0 %v87
  %246 = vmatprep.subr.mxu0 0.0
  %247 = vmatpush2.msra.mxu0 %v86
  %248 = vmatprep.subr.mxu0 0.0
  %249 = vmatpush2.msra.mxu0 %v85
  %250 = vmatprep.subr.mxu0 0.0
  %251 = vmatpush2.msra.mxu0 %v84
  %252 = vmatprep.subr.mxu0 0.0
  %253 = vmatpush2.msra.mxu0 %v83
  %254 = vmatprep.subr.mxu0 0.0
  %255 = vmatpush2.msra.mxu0 %v82
  %256 = vmatprep.subr.mxu0 0.0
  %257 = vmatpush2.msra.mxu0 %v81
  %258 = vmatprep.subr.mxu0 0.0
  %259 = vmatpush2.msra.mxu0 %v80
  %260 = vmatprep.subr.mxu0 0.0
  %261 = vmatpush2.msra.mxu0 %v79
  %262 = vmatprep.subr.mxu0 0.0
  %263 = vmatpush2.msra.mxu0 %v78
  %264 = vmatprep.subr.mxu0 0.0
  %265 = vmatpush2.msra.mxu0 %v77
  %266 = vmatprep.subr.mxu0 0.0
  %267 = vmatpush2.msra.mxu0 %v76
  %268 = vmatprep.subr.mxu0 0.0
  %269 = vmatpush2.msra.mxu0 %v75
  %270 = vmatprep.mubr.f32.mxu0 %v23
  %271 = vmatmul.mubr.f32.gmra.mxu0 %v22
  %v272 = vpop.f32.mrf.mxu0
  %v273 = vadd.f32 %v203, %v272
  %v274 = vpop.f32.mrf.mxu0
  %275 = vdwg.mxu0
  %276 = vmatprep.subr.mxu0 0.0
  %277 = vmatpush1.msra.mxu0 %v106
  %278 = vmatprep.subr.mxu0 0.0
  %279 = vmatpush1.msra.mxu0 %v105
  %280 = vmatprep.subr.mxu0 0.0
  %281 = vmatpush1.msra.mxu0 %v104
  %282 = vmatprep.subr.mxu0 0.0
  %283 = vmatpush1.msra.mxu0 %v103
  %284 = vmatprep.subr.mxu0 0.0
  %285 = vmatpush1.msra.mxu0 %v102
  %286 = vmatprep.subr.mxu0 0.0
  %287 = vmatpush1.msra.mxu0 %v101
  %288 = vmatprep.subr.mxu0 0.0
  %289 = vmatpush1.msra.mxu0 %v100
  %290 = vmatprep.subr.mxu0 0.0
  %291 = vmatpush1.msra.mxu0 %v99
  %292 = vmatprep.subr.mxu0 0.0
  %293 = vmatpush1.msra.mxu0 %v98
  %294 = vmatprep.subr.mxu0 0.0
  %295 = vmatpush1.msra.mxu0 %v97
  %296 = vmatprep.subr.mxu0 0.0
  %297 = vmatpush1.msra.mxu0 %v96
  %298 = vmatprep.subr.mxu0 0.0
  %299 = vmatpush1.msra.mxu0 %v95
  %300 = vmatprep.subr.mxu0 0.0
  %301 = vmatpush1.msra.mxu0 %v94
  %302 = vmatprep.subr.mxu0 0.0
  %303 = vmatpush1.msra.mxu0 %v93
  %304 = vmatprep.subr.mxu0 0.0
  %305 = vmatpush1.msra.mxu0 %v92
  %306 = vmatprep.subr.mxu0 0.0
  %307 = vmatpush1.msra.mxu0 %v91
  %308 = vmatprep.subr.mxu0 0.0
  %309 = vmatpush2.msra.mxu0 %v122
  %310 = vmatprep.subr.mxu0 0.0
  %311 = vmatpush2.msra.mxu0 %v121
  %312 = vmatprep.subr.mxu0 0.0
  %313 = vmatpush2.msra.mxu0 %v120
  %314 = vmatprep.subr.mxu0 0.0
  %315 = vmatpush2.msra.mxu0 %v119
  %316 = vmatprep.subr.mxu0 0.0
  %317 = vmatpush2.msra.mxu0 %v118
  %318 = vmatprep.subr.mxu0 0.0
  %319 = vmatpush2.msra.mxu0 %v117
  %320 = vmatprep.subr.mxu0 0.0
  %321 = vmatpush2.msra.mxu0 %v116
  %322 = vmatprep.subr.mxu0 0.0
  %323 = vmatpush2.msra.mxu0 %v115
  %324 = vmatprep.subr.mxu0 0.0
  %325 = vmatpush2.msra.mxu0 %v114
  %326 = vmatprep.subr.mxu0 0.0
  %327 = vmatpush2.msra.mxu0 %v113
  %328 = vmatprep.subr.mxu0 0.0
  %329 = vmatpush2.msra.mxu0 %v112
  %330 = vmatprep.subr.mxu0 0.0
  %331 = vmatpush2.msra.mxu0 %v111
  %332 = vmatprep.subr.mxu0 0.0
  %333 = vmatpush2.msra.mxu0 %v110
  %334 = vmatprep.subr.mxu0 0.0
  %335 = vmatpush2.msra.mxu0 %v109
  %336 = vmatprep.subr.mxu0 0.0
  %337 = vmatpush2.msra.mxu0 %v108
  %338 = vmatprep.subr.mxu0 0.0
  %339 = vmatpush2.msra.mxu0 %v107
  %340 = vmatprep.mubr.f32.mxu0 %v25
  %341 = vmatmul.mubr.f32.gmra.mxu0 %v24
  %v342 = vpop.f32.mrf.mxu0
  %v343 = vadd.f32 %v273, %v342
  %v344 = vpop.f32.mrf.mxu0
  %345 = vdwg.mxu0
  %346 = vmatprep.subr.mxu0 0.0
  %347 = vmatpush1.msra.mxu0 0.0
  %348 = vmatprep.subr.mxu0 0.0
  %349 = vmatpush1.msra.mxu0 0.0
  %350 = vmatprep.subr.mxu0 0.0
  %351 = vmatpush1.msra.mxu0 0.0
  %352 = vmatprep.subr.mxu0 0.0
  %353 = vmatpush1.msra.mxu0 0.0
  %354 = vmatprep.subr.mxu0 0.0
  %355 = vmatpush1.msra.mxu0 0.0
  %356 = vmatprep.subr.mxu0 0.0
  %357 = vmatpush1.msra.mxu0 0.0
  %358 = vmatprep.subr.mxu0 0.0
  %359 = vmatpush1.msra.mxu0 0.0
  %360 = vmatprep.subr.mxu0 0.0
  %361 = vmatpush1.msra.mxu0 0.0
  %362 = vmatprep.subr.mxu0 0.0
  %363 = vmatpush1.msra.mxu0 0.0
  %364 = vmatprep.subr.mxu0 0.0
  %365 = vmatpush1.msra.mxu0 0.0
  %366 = vmatprep.subr.mxu0 0.0
  %367 = vmatpush1.msra.mxu0 0.0
  %368 = vmatprep.subr.mxu0 0.0
  %369 = vmatpush1.msra.mxu0 0.0
  %370 = vmatprep.subr.mxu0 0.0
  %371 = vmatpush1.msra.mxu0 0.0
  %372 = vmatprep.subr.mxu0 0.0
  %373 = vmatpush1.msra.mxu0 0.0
  %374 = vmatprep.subr.mxu0 0.0
  %375 = vmatpush1.msra.mxu0 %v124
  %376 = vmatprep.subr.mxu0 0.0
  %377 = vmatpush1.msra.mxu0 %v123
  %378 = vmatprep.subr.mxu0 0.0
  %379 = vmatpush2.msra.mxu0 0.0
  %380 = vmatprep.subr.mxu0 0.0
  %381 = vmatpush2.msra.mxu0 0.0
  %382 = vmatprep.subr.mxu0 0.0
  %383 = vmatpush2.msra.mxu0 0.0
  %384 = vmatprep.subr.mxu0 0.0
  %385 = vmatpush2.msra.mxu0 0.0
  %386 = vmatprep.subr.mxu0 0.0
  %387 = vmatpush2.msra.mxu0 0.0
  %388 = vmatprep.subr.mxu0 0.0
  %389 = vmatpush2.msra.mxu0 0.0
  %390 = vmatprep.subr.mxu0 0.0
  %391 = vmatpush2.msra.mxu0 0.0
  %392 = vmatprep.subr.mxu0 0.0
  %393 = vmatpush2.msra.mxu0 0.0
  %394 = vmatprep.subr.mxu0 0.0
  %395 = vmatpush2.msra.mxu0 0.0
  %396 = vmatprep.subr.mxu0 0.0
  %397 = vmatpush2.msra.mxu0 0.0
  %398 = vmatprep.subr.mxu0 0.0
  %399 = vmatpush2.msra.mxu0 0.0
  %400 = vmatprep.subr.mxu0 0.0
  %401 = vmatpush2.msra.mxu0 0.0
  %402 = vmatprep.subr.mxu0 0.0
  %403 = vmatpush2.msra.mxu0 0.0
  %404 = vmatprep.subr.mxu0 0.0
  %405 = vmatpush2.msra.mxu0 0.0
  %406 = vmatprep.subr.mxu0 0.0
  %407 = vmatpush2.msra.mxu0 0.0
  %408 = vmatprep.subr.mxu0 0.0
  %409 = vmatpush2.msra.mxu0 0.0
  %410 = vmatprep.mubr.f32.mxu0 0.0
  %411 = vmatmul.mubr.f32.gmra.mxu0 %v134
  %v412 = vpop.f32.mrf.mxu0
  %v413 = vadd.f32 %v343, %v412
  %v414 = vpop.f32.mrf.mxu0
  %415 = vdwg.mxu0
  %v416 = vtanh.pop %v413
  %v417 = vld [vmem:[%s3] sm:$0xff]
  %v418 = vld [vmem:[%s3 + $0x8] sm:$0xff]
  %v419 = vld [vmem:[%s3 + $0x10] sm:$0xff]
  %v420 = vld [vmem:[%s3 + $0x18] sm:$0xff]
  %v421 = vld [vmem:[%s3 + $0x20] sm:$0xff]
  %v422 = vld [vmem:[%s3 + $0x28] sm:$0xff]
  %v423 = vld [vmem:[%s3 + $0x30] sm:$0xff]
  %v424 = vld [vmem:[%s3 + $0x38] sm:$0xff]
  %v425 = vld [vmem:[%s3 + $0x40] sm:$0xff]
  %v426 = vld [vmem:[%s3 + $0x48] sm:$0xff]
  %v427 = vld [vmem:[%s3 + $0x50] sm:$0xff]
  %v428 = vld [vmem:[%s3 + $0x58] sm:$0xff]
  %v429 = vld [vmem:[%s3 + $0x60] sm:$0xff]
  %v430 = vld [vmem:[%s3 + $0x68] sm:$0xff]
  %v431 = vld [vmem:[%s3 + $0x70] sm:$0xff]
  %v432 = vld [vmem:[%s3 + $0x78] sm:$0xff]
  %v433 = vld [vmem:[%s4] sm:$0x1]
  %v435 = vlaneseq
  %v436 = vshrl.u32 %v435, 7
  %v437 = vsub.s32 0, %v436
  %v438 = vrot.slane %v433, %v437
  %440 = vmatprep.subr.mxu0 0.0
  %441 = vmatpush1.msra.mxu0 %v432
  %442 = vmatprep.subr.mxu0 0.0
  %443 = vmatpush1.msra.mxu0 %v431
  %444 = vmatprep.subr.mxu0 0.0
  %445 = vmatpush1.msra.mxu0 %v430
  %446 = vmatprep.subr.mxu0 0.0
  %447 = vmatpush1.msra.mxu0 %v429
  %448 = vmatprep.subr.mxu0 0.0
  %449 = vmatpush1.msra.mxu0 %v428
  %450 = vmatprep.subr.mxu0 0.0
  %451 = vmatpush1.msra.mxu0 %v427
  %452 = vmatprep.subr.mxu0 0.0
  %453 = vmatpush1.msra.mxu0 %v426
  %454 = vmatprep.subr.mxu0 0.0
  %455 = vmatpush1.msra.mxu0 %v425
  %456 = vmatprep.subr.mxu0 0.0
  %457 = vmatpush1.msra.mxu0 %v424
  %458 = vmatprep.subr.mxu0 0.0
  %459 = vmatpush1.msra.mxu0 %v423
  %460 = vmatprep.subr.mxu0 0.0
  %461 = vmatpush1.msra.mxu0 %v422
  %462 = vmatprep.subr.mxu0 0.0
  %463 = vmatpush1.msra.mxu0 %v421
  %464 = vmatprep.subr.mxu0 0.0
  %465 = vmatpush1.msra.mxu0 %v420
  %466 = vmatprep.subr.mxu0 0.0
  %467 = vmatpush1.msra.mxu0 %v419
  %468 = vmatprep.subr.mxu0 0.0
  %469 = vmatpush1.msra.mxu0 %v418
  %470 = vmatprep.subr.mxu0 0.0
  %471 = vmatpush1.msra.mxu0 %v417
  %472 = vmatprep.subr.mxu0 0.0
  %473 = vmatpush2.msra.mxu0 0.0
  %474 = vmatprep.subr.mxu0 0.0
  %475 = vmatpush2.msra.mxu0 0.0
  %476 = vmatprep.subr.mxu0 0.0
  %477 = vmatpush2.msra.mxu0 0.0
  %478 = vmatprep.subr.mxu0 0.0
  %479 = vmatpush2.msra.mxu0 0.0
  %480 = vmatprep.subr.mxu0 0.0
  %481 = vmatpush2.msra.mxu0 0.0
  %482 = vmatprep.subr.mxu0 0.0
  %483 = vmatpush2.msra.mxu0 0.0
  %484 = vmatprep.subr.mxu0 0.0
  %485 = vmatpush2.msra.mxu0 0.0
  %486 = vmatprep.subr.mxu0 0.0
  %487 = vmatpush2.msra.mxu0 0.0
  %488 = vmatprep.subr.mxu0 0.0
  %489 = vmatpush2.msra.mxu0 0.0
  %490 = vmatprep.subr.mxu0 0.0
  %491 = vmatpush2.msra.mxu0 0.0
  %492 = vmatprep.subr.mxu0 0.0
  %493 = vmatpush2.msra.mxu0 0.0
  %494 = vmatprep.subr.mxu0 0.0
  %495 = vmatpush2.msra.mxu0 0.0
  %496 = vmatprep.subr.mxu0 0.0
  %497 = vmatpush2.msra.mxu0 0.0
  %498 = vmatprep.subr.mxu0 0.0
  %499 = vmatpush2.msra.mxu0 0.0
  %500 = vmatprep.subr.mxu0 0.0
  %501 = vmatpush2.msra.mxu0 0.0
  %502 = vmatprep.subr.mxu0 0.0
  %503 = vmatpush2.msra.mxu0 0.0
  %504 = vmatprep.mubr.f32.mxu0 0.0
  %505 = vmatmul.mubr.f32.gmra.mxu0 %v416
  %v506 = vpop.f32.mrf.mxu0
  %v507 = vadd.f32 %v438, %v506
  %v508 = vpop.f32.mrf.mxu0
  %509 = vdwg.mxu0
  %510 = vmax.xlane.f32.xlu0 %v507
  %v511 = vpop.xlane.xlu0 %510
  %v512 = vsub.f32 %v507, %v511
  %v513 = vmul.f32 %v512, 1.442695
  %v514 = vpow.pop %v513
  %515 = vadd.xlane.f32.xlu0 %v514
  %v516 = vpop.xlane.xlu0 %515
  %v517 = vlog2.pop %v516
  %v518 = vmul.f32 %v517, 0.6931472
  %v519 = vsub.f32 %v512, %v518
  %520 = vst [vmem:[%s5] sm:$0xff] %v519
  // Predicated region
  $region22: #{lenet_forward.5} parent=0 // pred_check
    _
  $region23: #{lenet_forward.5} parent=0 // pred_check_branch
    %522 = sbr.rel (0) target = $region25
  $region24: #{lenet_forward.5} parent=0 // pred_region
    _
  $region25: #{lenet_forward.5} parent=0 // pred_fallthru
    _
  // Predicated region
  $region26: #{lenet_forward.5} parent=0 // pred_check
    _
  $region27: #{lenet_forward.5} parent=0 // pred_check_branch
    %524 = sbr.rel (0) target = $region29
  $region28: #{lenet_forward.5} parent=0 // pred_region
    _
  $region29: #{lenet_forward.5} parent=0 // pred_fallthru
    _

</llo_original>
